<compile_context>
chip_gen: v7x
topology: tpu7x:2x2x1
jax: 0.10.0
libtpu: 0.0.40
codegen_flags: <defaults>
</compile_context>

<pallas_src>
import functools

import jax
import jax.numpy as jnp
from jax.experimental import pallas as pl
from jax.experimental.pallas import tpu as pltpu

LANE = 128  # TPU lane width


def _round_up(x: int, m: int) -> int:
    return ((x + m - 1) // m) * m


def make_autoencoder_kernel(n_enc: int, n_total: int):
    """Kernel for a chain of n_total Linear layers (encoder then decoder).

    ReLU after every layer except the encoder bottleneck (index n_enc - 1)
    and the final decoder output (index n_total - 1) -- matches PyTorch.
    """

    def kernel(x_ref, w_ref, b_ref, enc_ref, dec_ref):
        # x_ref: (TB, P) bf16  -- already MXU-ready, no cast needed.
        # w_ref: (L, P, P) bf16, b_ref: (L, 1, P) f32 (VMEM-resident).
        h = x_ref[...]
        z = None
        for i in range(n_total):
            # MXU fast path: bf16 x bf16 -> f32 accumulate; bias/ReLU in f32.
            z = (
                jnp.dot(h, w_ref[i], preferred_element_type=jnp.float32)
                + b_ref[i]
            )
            is_bottleneck = i == n_enc - 1
            is_last = i == n_total - 1
            if not (is_bottleneck or is_last):
                z = jnp.maximum(z, 0.0)
            if is_bottleneck:
                enc_ref[...] = z.astype(enc_ref.dtype)
            if not is_last:
                h = z.astype(jnp.bfloat16)  # operand for the next matmul
        dec_ref[...] = z.astype(dec_ref.dtype)

    return kernel


def prepare_params(weights, biases):
    """One-time parameter prep (call OUTSIDE the hot path).

    Pads every layer to the global lane-rounded width P, casts weights to
    bf16, and stacks:
      w_stack: (L, P, P) bf16
      b_stack: (L, 1, P) f32
    Zero padding is exact: padded output lanes stay identically zero through
    matmul + zero bias + ReLU, so they never contaminate later layers.
    """
    dims_all = [weights[0].shape[0]] + [w.shape[1] for w in weights]
    P = _round_up(max(dims_all), LANE)
    w_stack = jnp.stack(
        [
            jnp.pad(w, ((0, P - w.shape[0]), (0, P - w.shape[1]))).astype(
                jnp.bfloat16
            )
            for w in weights
        ]
    )
    b_stack = jnp.stack(
        [
            jnp.pad(b, ((0, 0), (0, P - b.shape[1]))).astype(jnp.float32)
            for b in biases
        ]
    )
    return w_stack, b_stack


@functools.partial(
    jax.jit, static_argnames=("n_enc", "d_enc", "tb", "trim")
)
def autoencoder_forward(x, w_stack, b_stack, *, n_enc, d_enc, tb=256, trim=True):
    """Fused auto-encoder forward pass.

    Args:
      x: (batch, dims[0]) f32 input.
      w_stack: (L, P, P) bf16 stacked padded weights (from prepare_params).
      b_stack: (L, 1, P) f32 stacked padded biases (from prepare_params).
      n_enc: number of encoder linear layers (= len(dims) - 1).
      d_enc: bottleneck size dims[-1] (for trimming the encoded output).
      tb: batch tile (rows per grid step). 256+ recommended on v6e/v7x so the
          LHS fills the 256x256 MXU rows; v5e (4x128x128) is fine at 128.
      trim: if True, slice outputs back to logical shapes. If downstream code
          tolerates lane/batch padding, pass trim=False to skip two HBM copies.

    Returns:
      (encoded, decoded). Trimmed: (batch, d_enc) and (batch, dims[0]).
    """
    n_total, P, _ = w_stack.shape
    B, d_in = x.shape

    # Don't over-tile small batches (keeps the block (8,128)-legal).
    tb = min(tb, _round_up(B, 8))
    B_p = _round_up(B, tb)

    # bf16 input stream: halves activation HBM->VMEM bytes; padding is exact.
    x_p = jnp.pad(x, ((0, B_p - B), (0, P - d_in))).astype(jnp.bfloat16)

    kernel = make_autoencoder_kernel(n_enc, n_total)
    grid = (B_p // tb,)

    in_specs = [
        # Streaming activation tile (double-buffered by default).
        pl.BlockSpec((tb, P), lambda i: (i, 0)),
        # Constant-index params: single-buffer them (Buffered(1)) -- they are
        # VMEM-resident across all grid steps, double-buffering is waste.
        pl.BlockSpec(
            (n_total, P, P), lambda i: (0, 0, 0), pipeline_mode=pl.Buffered(1)
        ),
        pl.BlockSpec(
            (n_total, 1, P), lambda i: (0, 0, 0), pipeline_mode=pl.Buffered(1)
        ),
    ]
    out_specs = (
        pl.BlockSpec((tb, P), lambda i: (i, 0)),
        pl.BlockSpec((tb, P), lambda i: (i, 0)),
    )
    out_shape = (
        jax.ShapeDtypeStruct((B_p, P), jnp.float32),
        jax.ShapeDtypeStruct((B_p, P), jnp.float32),
    )

    # Explicit VMEM budget (v7x: 64 MiB physical / 32 MiB default scoped).
    vmem_need = (
        2 * tb * P * 2          # x tile, bf16, double-buffered
        + n_total * P * P * 2   # weights, bf16, single-buffered
        + n_total * P * 4       # biases, f32, single-buffered
        + 2 * 2 * tb * P * 4    # enc/dec output tiles, f32, double-buffered
    )
    vmem_limit = int(min(max(2 * vmem_need, 8 << 20), 64 << 20))

    flops = 2 * B_p * n_total * P * P
    bytes_accessed = (
        B_p * P * 2             # x (bf16)
        + n_total * P * P * 2   # weights (bf16)
        + n_total * P * 4       # biases (f32)
        + 2 * B_p * P * 4       # enc + dec outputs (f32)
    )

    encoded_p, decoded_p = pl.pallas_call(
        kernel,
        grid_spec=pl.GridSpec(grid=grid, in_specs=in_specs, out_specs=out_specs),
        out_shape=out_shape,
        compiler_params=pltpu.CompilerParams(
            dimension_semantics=("parallel",),  # megacore sharding on v7x
            vmem_limit_bytes=vmem_limit,
        ),
        cost_estimate=pl.CostEstimate(
            flops=flops, transcendentals=0, bytes_accessed=bytes_accessed
        ),
    )(x_p, w_stack, b_stack)

    if trim:
        return encoded_p[:B, :d_enc], decoded_p[:B, :d_in]
    return encoded_p, decoded_p


def init_autoencoder_params(dims, key):
    """Parameter init matching the PyTorch module's layer shapes.

    Encoder: dims[0]->dims[1]-> ... ->dims[-1]
    Decoder: dims[-1]->dims[-2]-> ... ->dims[0]
    nn.Linear default-ish init: U(-1/sqrt(in), 1/sqrt(in)).
    """
    layer_dims = []
    for i in range(len(dims) - 1):                # encoder
        layer_dims.append((dims[i], dims[i + 1]))
    for i in range(len(dims) - 1, 0, -1):         # decoder (symmetric)
        layer_dims.append((dims[i], dims[i - 1]))

    weights, biases = [], []
    for (d_in, d_out) in layer_dims:
        key, kw, kb = jax.random.split(key, 3)
        bound = 1.0 / jnp.sqrt(jnp.float32(d_in))
        w = jax.random.uniform(
            kw, (d_in, d_out), jnp.float32, minval=-bound, maxval=bound
        )
        b = jax.random.uniform(
            kb, (1, d_out), jnp.float32, minval=-bound, maxval=bound
        )
        weights.append(w)
        biases.append(b)
    return tuple(weights), tuple(biases)


def reference_forward(x, weights, biases, n_enc):
    """Pure-JAX reference replicating the PyTorch forward at the same
    precision as the kernel (bf16 matmul operands, f32 accumulation)."""
    n_total = len(weights)
    h = x.astype(jnp.float32)
    encoded = None
    for i in range(n_total):
        h = (
            jnp.dot(
                h.astype(jnp.bfloat16),
                weights[i].astype(jnp.bfloat16),
                preferred_element_type=jnp.float32,
            )
            + biases[i]
        )
        is_bottleneck = i == n_enc - 1
        is_last = i == n_total - 1
        if not is_bottleneck and not is_last:
            h = jnp.maximum(h, 0.0)
        if is_bottleneck:
            encoded = h
    return encoded, h


if __name__ == "__main__":
    # dims[0] is input dim, dims[-1] is the bottleneck size.
    dims = [64, 32, 16, 8]
    batch = 512          # two grid steps at TB=256; exercises batch tiling
    n_enc = len(dims) - 1

    key = jax.random.PRNGKey(0)
    key, kx = jax.random.split(key)
    x = jax.random.normal(kx, (batch, dims[0]), jnp.float32)

    weights, biases = init_autoencoder_params(dims, key)

    # One-time parameter prep (pad + bf16 cast + stack) outside the hot path.
    w_stack, b_stack = prepare_params(weights, biases)
    w_stack, b_stack = jax.block_until_ready((w_stack, b_stack))

    encoded, decoded = autoencoder_forward(
        x, w_stack, b_stack, n_enc=n_enc, d_enc=dims[-1]
    )
    encoded, decoded = jax.block_until_ready((encoded, decoded))

    enc_ref, dec_ref = reference_forward(x, weights, biases, n_enc)

    assert encoded.shape == (batch, dims[-1]), encoded.shape
    assert decoded.shape == (batch, dims[0]), decoded.shape
    assert jnp.allclose(encoded, enc_ref, atol=1e-3, rtol=1e-3), (
        float(jnp.max(jnp.abs(encoded - enc_ref)))
    )
    assert jnp.allclose(decoded, dec_ref, atol=1e-3, rtol=1e-3), (
        float(jnp.max(jnp.abs(decoded - dec_ref)))
    )

    print("KERNEL_OK")
</pallas_src>

<mosaic_0001>
module attributes {stable_mosaic.version = 11 : i64} {
  func.func @kernel(%arg0: i32, %arg1: memref<256x128xbf16, #tpu.memory_space<vmem>>, %arg2: memref<6x128x128xbf16, #tpu.memory_space<vmem>>, %arg3: memref<6x1x128xf32, #tpu.memory_space<vmem>>, %arg4: memref<256x128xf32, #tpu.memory_space<vmem>>, %arg5: memref<256x128xf32, #tpu.memory_space<vmem>>) attributes {dimension_semantics = [#tpu.dimension_semantics<parallel>], iteration_bounds = array<i64: 2>, scalar_prefetch = 0 : i64, scratch_operands = 0 : i64, tpu.core_type = #tpu.core_type<tc>, window_params = [{transform_indices = @transform_0, window_bounds = array<i64: 256, 128>}, {pipeline_mode = #tpu.pipeline_mode<synchronous>, transform_indices = @transform_1, window_bounds = array<i64: 6, 128, 128>}, {pipeline_mode = #tpu.pipeline_mode<synchronous>, transform_indices = @transform_2, window_bounds = array<i64: 6, 1, 128>}, {transform_indices = @transform_3, window_bounds = array<i64: 256, 128>}, {transform_indices = @transform_4, window_bounds = array<i64: 256, 128>}]} {
    %c0 = arith.constant 0 : index
    %c0_0 = arith.constant 0 : index
    %0 = vector.load %arg1[%c0, %c0_0] : memref<256x128xbf16, #tpu.memory_space<vmem>>, vector<256x128xbf16>
    %c0_1 = arith.constant 0 : index
    %c0_2 = arith.constant 0 : index
    %c0_3 = arith.constant 0 : index
    %1 = vector.load %arg2[%c0_1, %c0_2, %c0_3] : memref<6x128x128xbf16, #tpu.memory_space<vmem>>, vector<1x128x128xbf16>
    %2 = vector.shape_cast %1 : vector<1x128x128xbf16> to vector<128x128xbf16>
    %cst = arith.constant dense<0.000000e+00> : vector<256x128xf32>
    %3 = tpu.matmul %0, %2, %cst {dimension_numbers = #tpu.dot_dimension_numbers<[1], [0], [0], [1], [0, 0, 1, 1], [], []>} : vector<256x128xbf16>, vector<128x128xbf16>, vector<256x128xf32> -> vector<256x128xf32>
    %c0_4 = arith.constant 0 : index
    %c0_5 = arith.constant 0 : index
    %c0_6 = arith.constant 0 : index
    %4 = vector.load %arg3[%c0_4, %c0_5, %c0_6] : memref<6x1x128xf32, #tpu.memory_space<vmem>>, vector<1x1x128xf32>
    %5 = vector.shape_cast %4 : vector<1x1x128xf32> to vector<1x128xf32>
    %6 = vector.broadcast %5 : vector<1x128xf32> to vector<256x128xf32>
    %7 = arith.addf %3, %6 : vector<256x128xf32>
    %cst_7 = arith.constant 0.000000e+00 : f32
    %8 = vector.broadcast %cst_7 : f32 to vector<256x128xf32>
    %9 = arith.maximumf %7, %8 : vector<256x128xf32>
    %10 = arith.truncf %9 : vector<256x128xf32> to vector<256x128xbf16>
    %c1 = arith.constant 1 : index
    %c0_8 = arith.constant 0 : index
    %c0_9 = arith.constant 0 : index
    %11 = vector.load %arg2[%c1, %c0_8, %c0_9] : memref<6x128x128xbf16, #tpu.memory_space<vmem>>, vector<1x128x128xbf16>
    %12 = vector.shape_cast %11 : vector<1x128x128xbf16> to vector<128x128xbf16>
    %cst_10 = arith.constant dense<0.000000e+00> : vector<256x128xf32>
    %13 = tpu.matmul %10, %12, %cst_10 {dimension_numbers = #tpu.dot_dimension_numbers<[1], [0], [0], [1], [0, 0, 1, 1], [], []>} : vector<256x128xbf16>, vector<128x128xbf16>, vector<256x128xf32> -> vector<256x128xf32>
    %c1_11 = arith.constant 1 : index
    %c0_12 = arith.constant 0 : index
    %c0_13 = arith.constant 0 : index
    %14 = vector.load %arg3[%c1_11, %c0_12, %c0_13] : memref<6x1x128xf32, #tpu.memory_space<vmem>>, vector<1x1x128xf32>
    %15 = vector.shape_cast %14 : vector<1x1x128xf32> to vector<1x128xf32>
    %16 = vector.broadcast %15 : vector<1x128xf32> to vector<256x128xf32>
    %17 = arith.addf %13, %16 : vector<256x128xf32>
    %cst_14 = arith.constant 0.000000e+00 : f32
    %18 = vector.broadcast %cst_14 : f32 to vector<256x128xf32>
    %19 = arith.maximumf %17, %18 : vector<256x128xf32>
    %20 = arith.truncf %19 : vector<256x128xf32> to vector<256x128xbf16>
    %c2 = arith.constant 2 : index
    %c0_15 = arith.constant 0 : index
    %c0_16 = arith.constant 0 : index
    %21 = vector.load %arg2[%c2, %c0_15, %c0_16] : memref<6x128x128xbf16, #tpu.memory_space<vmem>>, vector<1x128x128xbf16>
    %22 = vector.shape_cast %21 : vector<1x128x128xbf16> to vector<128x128xbf16>
    %cst_17 = arith.constant dense<0.000000e+00> : vector<256x128xf32>
    %23 = tpu.matmul %20, %22, %cst_17 {dimension_numbers = #tpu.dot_dimension_numbers<[1], [0], [0], [1], [0, 0, 1, 1], [], []>} : vector<256x128xbf16>, vector<128x128xbf16>, vector<256x128xf32> -> vector<256x128xf32>
    %c2_18 = arith.constant 2 : index
    %c0_19 = arith.constant 0 : index
    %c0_20 = arith.constant 0 : index
    %24 = vector.load %arg3[%c2_18, %c0_19, %c0_20] : memref<6x1x128xf32, #tpu.memory_space<vmem>>, vector<1x1x128xf32>
    %25 = vector.shape_cast %24 : vector<1x1x128xf32> to vector<1x128xf32>
    %26 = vector.broadcast %25 : vector<1x128xf32> to vector<256x128xf32>
    %27 = arith.addf %23, %26 : vector<256x128xf32>
    %c0_21 = arith.constant 0 : index
    %c0_22 = arith.constant 0 : index
    %28 = vector.load %arg4[%c0_21, %c0_22] : memref<256x128xf32, #tpu.memory_space<vmem>>, vector<256x128xf32>
    tpu.vector_store %arg4[%c0_21, %c0_22], %27 {strides = array<i32>} : memref<256x128xf32, #tpu.memory_space<vmem>>, vector<256x128xf32>,
    %29 = arith.truncf %27 : vector<256x128xf32> to vector<256x128xbf16>
    %c3 = arith.constant 3 : index
    %c0_23 = arith.constant 0 : index
    %c0_24 = arith.constant 0 : index
    %30 = vector.load %arg2[%c3, %c0_23, %c0_24] : memref<6x128x128xbf16, #tpu.memory_space<vmem>>, vector<1x128x128xbf16>
    %31 = vector.shape_cast %30 : vector<1x128x128xbf16> to vector<128x128xbf16>
    %cst_25 = arith.constant dense<0.000000e+00> : vector<256x128xf32>
    %32 = tpu.matmul %29, %31, %cst_25 {dimension_numbers = #tpu.dot_dimension_numbers<[1], [0], [0], [1], [0, 0, 1, 1], [], []>} : vector<256x128xbf16>, vector<128x128xbf16>, vector<256x128xf32> -> vector<256x128xf32>
    %c3_26 = arith.constant 3 : index
    %c0_27 = arith.constant 0 : index
    %c0_28 = arith.constant 0 : index
    %33 = vector.load %arg3[%c3_26, %c0_27, %c0_28] : memref<6x1x128xf32, #tpu.memory_space<vmem>>, vector<1x1x128xf32>
    %34 = vector.shape_cast %33 : vector<1x1x128xf32> to vector<1x128xf32>
    %35 = vector.broadcast %34 : vector<1x128xf32> to vector<256x128xf32>
    %36 = arith.addf %32, %35 : vector<256x128xf32>
    %cst_29 = arith.constant 0.000000e+00 : f32
    %37 = vector.broadcast %cst_29 : f32 to vector<256x128xf32>
    %38 = arith.maximumf %36, %37 : vector<256x128xf32>
    %39 = arith.truncf %38 : vector<256x128xf32> to vector<256x128xbf16>
    %c4 = arith.constant 4 : index
    %c0_30 = arith.constant 0 : index
    %c0_31 = arith.constant 0 : index
    %40 = vector.load %arg2[%c4, %c0_30, %c0_31] : memref<6x128x128xbf16, #tpu.memory_space<vmem>>, vector<1x128x128xbf16>
    %41 = vector.shape_cast %40 : vector<1x128x128xbf16> to vector<128x128xbf16>
    %cst_32 = arith.constant dense<0.000000e+00> : vector<256x128xf32>
    %42 = tpu.matmul %39, %41, %cst_32 {dimension_numbers = #tpu.dot_dimension_numbers<[1], [0], [0], [1], [0, 0, 1, 1], [], []>} : vector<256x128xbf16>, vector<128x128xbf16>, vector<256x128xf32> -> vector<256x128xf32>
    %c4_33 = arith.constant 4 : index
    %c0_34 = arith.constant 0 : index
    %c0_35 = arith.constant 0 : index
    %43 = vector.load %arg3[%c4_33, %c0_34, %c0_35] : memref<6x1x128xf32, #tpu.memory_space<vmem>>, vector<1x1x128xf32>
    %44 = vector.shape_cast %43 : vector<1x1x128xf32> to vector<1x128xf32>
    %45 = vector.broadcast %44 : vector<1x128xf32> to vector<256x128xf32>
    %46 = arith.addf %42, %45 : vector<256x128xf32>
    %cst_36 = arith.constant 0.000000e+00 : f32
    %47 = vector.broadcast %cst_36 : f32 to vector<256x128xf32>
    %48 = arith.maximumf %46, %47 : vector<256x128xf32>
    %49 = arith.truncf %48 : vector<256x128xf32> to vector<256x128xbf16>
    %c5 = arith.constant 5 : index
    %c0_37 = arith.constant 0 : index
    %c0_38 = arith.constant 0 : index
    %50 = vector.load %arg2[%c5, %c0_37, %c0_38] : memref<6x128x128xbf16, #tpu.memory_space<vmem>>, vector<1x128x128xbf16>
    %51 = vector.shape_cast %50 : vector<1x128x128xbf16> to vector<128x128xbf16>
    %cst_39 = arith.constant dense<0.000000e+00> : vector<256x128xf32>
    %52 = tpu.matmul %49, %51, %cst_39 {dimension_numbers = #tpu.dot_dimension_numbers<[1], [0], [0], [1], [0, 0, 1, 1], [], []>} : vector<256x128xbf16>, vector<128x128xbf16>, vector<256x128xf32> -> vector<256x128xf32>
    %c5_40 = arith.constant 5 : index
    %c0_41 = arith.constant 0 : index
    %c0_42 = arith.constant 0 : index
    %53 = vector.load %arg3[%c5_40, %c0_41, %c0_42] : memref<6x1x128xf32, #tpu.memory_space<vmem>>, vector<1x1x128xf32>
    %54 = vector.shape_cast %53 : vector<1x1x128xf32> to vector<1x128xf32>
    %55 = vector.broadcast %54 : vector<1x128xf32> to vector<256x128xf32>
    %56 = arith.addf %52, %55 : vector<256x128xf32>
    %c0_43 = arith.constant 0 : index
    %c0_44 = arith.constant 0 : index
    %57 = vector.load %arg5[%c0_43, %c0_44] : memref<256x128xf32, #tpu.memory_space<vmem>>, vector<256x128xf32>
    tpu.vector_store %arg5[%c0_43, %c0_44], %56 {strides = array<i32>} : memref<256x128xf32, #tpu.memory_space<vmem>>, vector<256x128xf32>,
    return
  }
  func.func @transform_0(%arg0: i32) -> (i32, i32) {
    %c0_i32 = arith.constant 0 : i32
    %c0_i32_0 = arith.constant 0 : i32
    return %arg0, %c0_i32 : i32, i32
  }
  func.func @transform_1(%arg0: i32) -> (i32, i32, i32) {
    %c0_i32 = arith.constant 0 : i32
    %c0_i32_0 = arith.constant 0 : i32
    %c0_i32_1 = arith.constant 0 : i32
    %c0_i32_2 = arith.constant 0 : i32
    return %c0_i32, %c0_i32_0, %c0_i32_1 : i32, i32, i32
  }
  func.func @transform_2(%arg0: i32) -> (i32, i32, i32) {
    %c0_i32 = arith.constant 0 : i32
    %c0_i32_0 = arith.constant 0 : i32
    %c0_i32_1 = arith.constant 0 : i32
    %c0_i32_2 = arith.constant 0 : i32
    return %c0_i32, %c0_i32_0, %c0_i32_1 : i32, i32, i32
  }
  func.func @transform_3(%arg0: i32) -> (i32, i32) {
    %c0_i32 = arith.constant 0 : i32
    %c0_i32_0 = arith.constant 0 : i32
    return %arg0, %c0_i32 : i32, i32
  }
  func.func @transform_4(%arg0: i32) -> (i32, i32) {
    %c0_i32 = arith.constant 0 : i32
    %c0_i32_0 = arith.constant 0 : i32
    return %arg0, %c0_i32 : i32, i32
  }
}

</mosaic_0001>

<llo_original>
// kernel: autoencoder_forward.1
$region0: #{autoencoder_forward.1}
  #allocation0 [shape = 'u32[]', space=smem, size = 0x4, offset = 0x4, fixed_abs, tag = 'smem constant byte address 0x4 - core index']
  #allocation1 [shape = 'u32[144,128]{1,0:T(1,128)}', space=vmem, size = 0x12000, scoped, tag = 'internal scratch']
  %s0 = inlined_call_operand.vmem [shape: bf16[512,128], index: 0, kind: input, shape index: {}]
  %s1 = inlined_call_operand.vmem [shape: bf16[6,128,128], index: 1, kind: input, shape index: {}]
  %s2 = inlined_call_operand.vmem [shape: f32[6,1,128], index: 2, kind: input, shape index: {}]
  %s3 = inlined_call_operand.vmem [shape: f32[512,128], index: 3, kind: output, shape index: {0}]
  %s4 = inlined_call_operand.vmem [shape: f32[512,128], index: 4, kind: output, shape index: {1}]
  %5 = xla_tuple %s3, %s4
  %s6 = sld [smem:[#allocation0]]
  $region53: #{autoencoder_forward.1} parent=0
    _
  %s8 = ssub.s32 1, %s6
  %s9 = scalar_select 0, %s8, %s6
  loop: start=0, step=1, limit=4
  $region2: #{autoencoder_forward.1} parent=0 // loop_pre_header
    _
  $region3: #{autoencoder_forward.1} parent=0 // loop_header
    %s11 = sphi 0, %s15
    %p12 = scmp.ge.s32.totalorder %s11, 4
    %s21 = sphi 0, %s23
    %s24 = sphi 0, %s21
    %s25 = sphi 0, %s24
    %s41 = sphi 0, %s25
    %s45 = sphi 0, %s45
    %s47 = sphi 0, %s45
    %s48 = sphi 0, %s47
    %s62 = sphi 0, %s48
    %s66 = sphi 0, %s66
    %s68 = sphi 0, %s66
    %s69 = sphi 0, %s68
    %s83 = sphi 0, %s69
    %s89 = sphi 0, %s91
    %s92 = sphi 0, %s89
    %s93 = sphi 0, %s92
    %s109 = sphi 0, %s93
    %s115 = sphi 0, %s117
    %s118 = sphi 0, %s115
    %s119 = sphi 0, %s118
    %s135 = sphi 0, %s119
  $region4: #{autoencoder_forward.1} parent=0 // loop_header_branch
    %14 = sbr.rel (%p12) target = $region8
  $region5: #{autoencoder_forward.1} parent=0 // loop_body
    %s16 = ssub.s32 %s11, 1
    %s17 = ssub.s32 %s11, 2
    %s18 = sadd.s32 %s11, 1
    %s19 = ssub.s32 %s11, %s18
    %p20 = scmp.eq.s32.totalorder %s19, 0
    %s22 = sadd.s32 %s21, 1
    %s23 = scalar_select %p20, %s21, %s22
    %p26 = pneg %p20
    %p27 = scmp.eq.s32.totalorder %s11, 1
    %p28 = por %p26, %p27
    %p29 = scmp.ne.s32.totalorder %s21, %s24
    %p30 = scmp.eq.s32.totalorder %s11, 0
    %p31 = por %p29, %p30
    %p32 = scmp.ne.s32.totalorder %s21, %s24
    %p33 = scmp.eq.s32.totalorder %s16, 1
    %p34 = por %p32, %p33
    %p35 = scmp.ne.s32.totalorder %s24, %s25
    %p36 = scmp.eq.s32.totalorder %s16, 0
    %p37 = por %p35, %p36
    %p38 = scmp.ne.s32.totalorder %s24, %s25
    %p39 = scmp.eq.s32.totalorder %s17, 1
    %p40 = por %p38, %p39
    %p42 = scmp.ne.s32.totalorder %s25, %s41
    %p43 = scmp.eq.s32.totalorder %s17, 0
    %p44 = por %p42, %p43
    %s46 = sadd.s32 %s45, 1
    %p49 = scmp.eq.s32.totalorder %s11, 1
    %p50 = scmp.ne.s32.totalorder %s45, %s47
    %p51 = scmp.eq.s32.totalorder %s11, 0
    %p52 = por %p50, %p51
    %p53 = scmp.ne.s32.totalorder %s45, %s47
    %p54 = scmp.eq.s32.totalorder %s16, 1
    %p55 = por %p53, %p54
    %p56 = scmp.ne.s32.totalorder %s47, %s48
    %p57 = scmp.eq.s32.totalorder %s16, 0
    %p58 = por %p56, %p57
    %p59 = scmp.ne.s32.totalorder %s47, %s48
    %p60 = scmp.eq.s32.totalorder %s17, 1
    %p61 = por %p59, %p60
    %p63 = scmp.ne.s32.totalorder %s48, %s62
    %p64 = scmp.eq.s32.totalorder %s17, 0
    %p65 = por %p63, %p64
    %s67 = sadd.s32 %s66, 1
    %p70 = scmp.eq.s32.totalorder %s11, 1
    %p71 = scmp.ne.s32.totalorder %s66, %s68
    %p72 = scmp.eq.s32.totalorder %s11, 0
    %p73 = por %p71, %p72
    %p74 = scmp.ne.s32.totalorder %s66, %s68
    %p75 = scmp.eq.s32.totalorder %s16, 1
    %p76 = por %p74, %p75
    %p77 = scmp.ne.s32.totalorder %s68, %s69
    %p78 = scmp.eq.s32.totalorder %s16, 0
    %p79 = por %p77, %p78
    %p80 = scmp.ne.s32.totalorder %s68, %s69
    %p81 = scmp.eq.s32.totalorder %s17, 1
    %p82 = por %p80, %p81
    %p84 = scmp.ne.s32.totalorder %s69, %s83
    %p85 = scmp.eq.s32.totalorder %s17, 0
    %p86 = por %p84, %p85
    %s87 = ssub.s32 %s11, %s18
    %p88 = scmp.eq.s32.totalorder %s87, 0
    %s90 = sadd.s32 %s89, 1
    %s91 = scalar_select %p88, %s89, %s90
    %p94 = pneg %p88
    %p95 = scmp.eq.s32.totalorder %s11, 1
    %p96 = por %p94, %p95
    %p97 = scmp.ne.s32.totalorder %s89, %s92
    %p98 = scmp.eq.s32.totalorder %s11, 0
    %p99 = por %p97, %p98
    %p100 = scmp.ne.s32.totalorder %s89, %s92
    %p101 = scmp.eq.s32.totalorder %s16, 1
    %p102 = por %p100, %p101
    %p103 = scmp.ne.s32.totalorder %s92, %s93
    %p104 = scmp.eq.s32.totalorder %s16, 0
    %p105 = por %p103, %p104
    %p106 = scmp.ne.s32.totalorder %s92, %s93
    %p107 = scmp.eq.s32.totalorder %s17, 1
    %p108 = por %p106, %p107
    %p110 = scmp.ne.s32.totalorder %s93, %s109
    %p111 = scmp.eq.s32.totalorder %s17, 0
    %p112 = por %p110, %p111
    %s113 = ssub.s32 %s11, %s18
    %p114 = scmp.eq.s32.totalorder %s113, 0
    %s116 = sadd.s32 %s115, 1
    %s117 = scalar_select %p114, %s115, %s116
    %p120 = pneg %p114
    %p121 = scmp.eq.s32.totalorder %s11, 1
    %p122 = por %p120, %p121
    %p123 = scmp.ne.s32.totalorder %s115, %s118
    %p124 = scmp.eq.s32.totalorder %s11, 0
    %p125 = por %p123, %p124
    %p126 = scmp.ne.s32.totalorder %s115, %s118
    %p127 = scmp.eq.s32.totalorder %s16, 1
    %p128 = por %p126, %p127
    %p129 = scmp.ne.s32.totalorder %s118, %s119
    %p130 = scmp.eq.s32.totalorder %s16, 0
    %p131 = por %p129, %p130
    %p132 = scmp.ne.s32.totalorder %s118, %s119
    %p133 = scmp.eq.s32.totalorder %s17, 1
    %p134 = por %p132, %p133
    %p136 = scmp.ne.s32.totalorder %s119, %s135
    %p137 = scmp.eq.s32.totalorder %s17, 0
    %p138 = por %p136, %p137
    %p139 = scmp.le.s32.totalorder 1, %s11
    %p140 = scmp.lt.s32.totalorder %s11, 3
    %p141 = pnand %p139, %p140
    %p142 = pneg %p141
    // Predicated region
    $region9: #{autoencoder_forward.1} parent=5 // pred_check
      _
    $region10: #{autoencoder_forward.1} parent=5 // pred_check_branch
      %144 = sbr.rel (%p141) target = $region12
    $region11: #{autoencoder_forward.1} parent=5 // pred_region
      %s145 = ssub.s32 %s11, 1
      // Predicated region
      $region13: #{autoencoder_forward.1} parent=11 // pred_check
        %p146 = pneg %p58
      $region14: #{autoencoder_forward.1} parent=11 // pred_check_branch
        %148 = sbr.rel (%p146) target = $region16
      $region15: #{autoencoder_forward.1} parent=11 // pred_region
        _
      $region16: #{autoencoder_forward.1} parent=11 // pred_fallthru
        _
      // Predicated region
      $region17: #{autoencoder_forward.1} parent=11 // pred_check
        %p149 = pneg %p79
      $region18: #{autoencoder_forward.1} parent=11 // pred_check_branch
        %151 = sbr.rel (%p149) target = $region20
      $region19: #{autoencoder_forward.1} parent=11 // pred_region
        _
      $region20: #{autoencoder_forward.1} parent=11 // pred_fallthru
        _
    $region12: #{autoencoder_forward.1} parent=5 // pred_fallthru
      _
    %p152 = scmp.lt.s32.totalorder %s11, 2
    // Predicated region
    $region21: #{autoencoder_forward.1} parent=5 // pred_check
      %p153 = pneg %p152
    $region22: #{autoencoder_forward.1} parent=5 // pred_check_branch
      %155 = sbr.rel (%p153) target = $region24
    $region23: #{autoencoder_forward.1} parent=5 // pred_region
      // Predicated region
      $region25: #{autoencoder_forward.1} parent=23 // pred_check
        %p156 = pneg %p31
      $region26: #{autoencoder_forward.1} parent=23 // pred_check_branch
        %158 = sbr.rel (%p156) target = $region28
      $region27: #{autoencoder_forward.1} parent=23 // pred_region
        %s159 = smul.u32 32, %s11
        %p160 = scmp.lt.s32.totalorder %s159, 63
        %s161 = scalar_select %p160, %s159, 63
        %s162 = smul.addr %s161, 4
        %s163 = scalar_lea.vmem %s0, %s162
        %s164 = smul.u32 32, %s11
      $region28: #{autoencoder_forward.1} parent=23 // pred_fallthru
        _
    $region24: #{autoencoder_forward.1} parent=5 // pred_fallthru
      _
    %p165 = scmp.le.s32.totalorder 1, %s11
    %p166 = scmp.lt.s32.totalorder %s11, 3
    %p167 = pnand %p165, %p166
    %p168 = pneg %p167
    // Predicated region
    $region29: #{autoencoder_forward.1} parent=5 // pred_check
      _
    $region30: #{autoencoder_forward.1} parent=5 // pred_check_branch
      %170 = sbr.rel (%p167) target = $region32
    $region31: #{autoencoder_forward.1} parent=5 // pred_region
      %s171 = ssub.s32 %s11, 1
      %s172 = smul.u32 32, %s16
      %p173 = scmp.lt.s32.totalorder %s172, 63
      %s174 = scalar_select %p173, %s172, 63
      %s175 = smul.addr %s174, 4
      %s176 = scalar_lea.vmem %s0, %s175
      %p177 = pneg %p37
      %p178 = pneg %p34
      %p179 = pneg %p58
      %p180 = pneg %p55
      %p181 = pneg %p79
      %p182 = pneg %p76
      %p183 = pneg %p105
      %p184 = pneg %p102
      %s185 = smul.u32 32, %s16
      %p186 = scmp.lt.s32.totalorder %s185, 63
      %s187 = scalar_select %p186, %s185, 63
      %s188 = smul.addr %s187, 8
      %s189 = scalar_lea.vmem %s3, %s188
      %p190 = pneg %p131
      %p191 = pneg %p128
      %s192 = smul.u32 32, %s16
      %p193 = scmp.lt.s32.totalorder %s192, 63
      %s194 = scalar_select %p193, %s192, 63
      %s195 = smul.addr %s194, 8
      %s196 = scalar_lea.vmem %s4, %s195
      %s197 = smul.u32 32, %s16
      %p198 = scmp.lt.s32.totalorder %s197, 63
      %s199 = scalar_select %p198, %s197, 63
      %s200 = smul.addr %s199, 4
      %s201 = scalar_lea.vmem %s0, %s200
      %s202 = smul.u32 32, %s16
      %s203 = smul.u32 32, %s16
      %p204 = scmp.lt.s32.totalorder %s203, 63
      %s205 = scalar_select %p204, %s203, 63
      %s206 = smul.addr %s205, 8
      %s207 = scalar_lea.vmem %s3, %s206
      %s208 = smul.u32 32, %s16
      %s209 = smul.u32 32, %s16
      %p210 = scmp.lt.s32.totalorder %s209, 63
      %s211 = scalar_select %p210, %s209, 63
      %s212 = smul.addr %s211, 8
      %s213 = scalar_lea.vmem %s4, %s212
      %s214 = smul.u32 32, %s16
      %v216 = vld [vmem:[%s201] sm:$0xf]
      %v217 = vld [vmem:[%s201 + $0x4] sm:$0xf]
      %v218 = vld [vmem:[%s201 + $0x8] sm:$0xf]
      %v219 = vld [vmem:[%s201 + $0xc] sm:$0xf]
      %v220 = vld [vmem:[%s201 + $0x10] sm:$0xf]
      %v221 = vld [vmem:[%s201 + $0x14] sm:$0xf]
      %v222 = vld [vmem:[%s201 + $0x18] sm:$0xf]
      %v223 = vld [vmem:[%s201 + $0x1c] sm:$0xf]
      %v224 = vld [vmem:[%s201 + $0x20] sm:$0xf]
      %v225 = vld [vmem:[%s201 + $0x24] sm:$0xf]
      %v226 = vld [vmem:[%s201 + $0x28] sm:$0xf]
      %v227 = vld [vmem:[%s201 + $0x2c] sm:$0xf]
      %v228 = vld [vmem:[%s201 + $0x30] sm:$0xf]
      %v229 = vld [vmem:[%s201 + $0x34] sm:$0xf]
      %v230 = vld [vmem:[%s201 + $0x38] sm:$0xf]
      %v231 = vld [vmem:[%s201 + $0x3c] sm:$0xf]
      %v232 = vld [vmem:[%s201 + $0x40] sm:$0xf]
      %v233 = vld [vmem:[%s201 + $0x44] sm:$0xf]
      %v234 = vld [vmem:[%s201 + $0x48] sm:$0xf]
      %v235 = vld [vmem:[%s201 + $0x4c] sm:$0xf]
      %v236 = vld [vmem:[%s201 + $0x50] sm:$0xf]
      %v237 = vld [vmem:[%s201 + $0x54] sm:$0xf]
      %v238 = vld [vmem:[%s201 + $0x58] sm:$0xf]
      %v239 = vld [vmem:[%s201 + $0x5c] sm:$0xf]
      %v240 = vld [vmem:[%s201 + $0x60] sm:$0xf]
      %v241 = vld [vmem:[%s201 + $0x64] sm:$0xf]
      %v242 = vld [vmem:[%s201 + $0x68] sm:$0xf]
      %v243 = vld [vmem:[%s201 + $0x6c] sm:$0xf]
      %v244 = vld [vmem:[%s201 + $0x70] sm:$0xf]
      %v245 = vld [vmem:[%s201 + $0x74] sm:$0xf]
      %v246 = vld [vmem:[%s201 + $0x78] sm:$0xf]
      %v247 = vld [vmem:[%s201 + $0x7c] sm:$0xf]
      %v248 = vld [vmem:[%s1] sm:$0xf]
      %v249 = vld [vmem:[%s1 + $0x4] sm:$0xf]
      %v250 = vld [vmem:[%s1 + $0x8] sm:$0xf]
      %v251 = vld [vmem:[%s1 + $0xc] sm:$0xf]
      %v252 = vld [vmem:[%s1 + $0x10] sm:$0xf]
      %v253 = vld [vmem:[%s1 + $0x14] sm:$0xf]
      %v254 = vld [vmem:[%s1 + $0x18] sm:$0xf]
      %v255 = vld [vmem:[%s1 + $0x1c] sm:$0xf]
      %v256 = vld [vmem:[%s1 + $0x20] sm:$0xf]
      %v257 = vld [vmem:[%s1 + $0x24] sm:$0xf]
      %v258 = vld [vmem:[%s1 + $0x28] sm:$0xf]
      %v259 = vld [vmem:[%s1 + $0x2c] sm:$0xf]
      %v260 = vld [vmem:[%s1 + $0x30] sm:$0xf]
      %v261 = vld [vmem:[%s1 + $0x34] sm:$0xf]
      %v262 = vld [vmem:[%s1 + $0x38] sm:$0xf]
      %v263 = vld [vmem:[%s1 + $0x3c] sm:$0xf]
      %v264 = vld [vmem:[%s2] sm:$0x1]
      %v266 = vlaneseq
      %v267 = vshrl.u32 %v266, 7
      %v268 = vsub.s32 0, %v267
      %v269 = vrot.slane %v264, %v268
      %v303 = vunpack.c.l.b16 %v216
      %v304 = vunpack.c.l.b16 %v217
      %v305 = vunpack.c.l.b16 %v218
      %v306 = vunpack.c.l.b16 %v219
      %v307 = vunpack.c.l.b16 %v220
      %v308 = vunpack.c.l.b16 %v221
      %v309 = vunpack.c.l.b16 %v222
      %v310 = vunpack.c.l.b16 %v223
      %v311 = vunpack.c.l.b16 %v224
      %v312 = vunpack.c.l.b16 %v225
      %v313 = vunpack.c.l.b16 %v226
      %v314 = vunpack.c.l.b16 %v227
      %v315 = vunpack.c.l.b16 %v228
      %v316 = vunpack.c.l.b16 %v229
      %v317 = vunpack.c.l.b16 %v230
      %v318 = vunpack.c.l.b16 %v231
      %v319 = vunpack.c.l.b16 %v232
      %v320 = vunpack.c.l.b16 %v233
      %v321 = vunpack.c.l.b16 %v234
      %v322 = vunpack.c.l.b16 %v235
      %v323 = vunpack.c.l.b16 %v236
      %v324 = vunpack.c.l.b16 %v237
      %v325 = vunpack.c.l.b16 %v238
      %v326 = vunpack.c.l.b16 %v239
      %v327 = vunpack.c.l.b16 %v240
      %v328 = vunpack.c.l.b16 %v241
      %v329 = vunpack.c.l.b16 %v242
      %v330 = vunpack.c.l.b16 %v243
      %v331 = vunpack.c.l.b16 %v244
      %v332 = vunpack.c.l.b16 %v245
      %v333 = vunpack.c.l.b16 %v246
      %v334 = vunpack.c.l.b16 %v247
      %v335 = vpack.c.b16 %v304, %v303
      %v336 = vpack.c.b16 %v306, %v305
      %v337 = vpack.c.b16 %v308, %v307
      %v338 = vpack.c.b16 %v310, %v309
      %v339 = vpack.c.b16 %v312, %v311
      %v340 = vpack.c.b16 %v314, %v313
      %v341 = vpack.c.b16 %v316, %v315
      %v342 = vpack.c.b16 %v318, %v317
      %v343 = vpack.c.b16 %v320, %v319
      %v344 = vpack.c.b16 %v322, %v321
      %v345 = vpack.c.b16 %v324, %v323
      %v346 = vpack.c.b16 %v326, %v325
      %v347 = vpack.c.b16 %v328, %v327
      %v348 = vpack.c.b16 %v330, %v329
      %v349 = vpack.c.b16 %v332, %v331
      %v350 = vpack.c.b16 %v334, %v333
      %v383 = vunpack.c.l.b16 %v248
      %v384 = vunpack.c.l.b16 %v249
      %v385 = vunpack.c.l.b16 %v250
      %v386 = vunpack.c.l.b16 %v251
      %v387 = vunpack.c.l.b16 %v252
      %v388 = vunpack.c.l.b16 %v253
      %v389 = vunpack.c.l.b16 %v254
      %v390 = vunpack.c.l.b16 %v255
      %v391 = vunpack.c.l.b16 %v256
      %v392 = vunpack.c.l.b16 %v257
      %v393 = vunpack.c.l.b16 %v258
      %v394 = vunpack.c.l.b16 %v259
      %v395 = vunpack.c.l.b16 %v260
      %v396 = vunpack.c.l.b16 %v261
      %v397 = vunpack.c.l.b16 %v262
      %v398 = vunpack.c.l.b16 %v263
      %v399 = vpack.c.b16 %v384, %v383
      %v400 = vpack.c.b16 %v386, %v385
      %v401 = vpack.c.b16 %v388, %v387
      %v402 = vpack.c.b16 %v390, %v389
      %v403 = vpack.c.b16 %v392, %v391
      %v404 = vpack.c.b16 %v394, %v393
      %v405 = vpack.c.b16 %v396, %v395
      %v406 = vpack.c.b16 %v398, %v397
      %415 = vmatprep.subr.bf16.mxu0 0
      %416 = vmatpush1.bf16.msra.mxu0 %v399
      %417 = vmatprep.subr.bf16.mxu0 0
      %418 = vmatpush1.bf16.msra.mxu0 %v400
      %419 = vmatprep.subr.bf16.mxu0 0
      %420 = vmatpush1.bf16.msra.mxu0 %v401
      %421 = vmatprep.subr.bf16.mxu0 0
      %422 = vmatpush1.bf16.msra.mxu0 %v402
      %423 = vmatprep.subr.bf16.mxu0 0
      %424 = vmatpush1.bf16.msra.mxu0 %v403
      %425 = vmatprep.subr.bf16.mxu0 0
      %426 = vmatpush1.bf16.msra.mxu0 %v404
      %427 = vmatprep.subr.bf16.mxu0 0
      %428 = vmatpush1.bf16.msra.mxu0 %v405
      %429 = vmatprep.subr.bf16.mxu0 0
      %430 = vmatpush1.bf16.msra.mxu0 %v406
      %431 = vmatprep.subr.bf16.mxu0 0
      %432 = vmatpush1.bf16.msra.mxu0 0
      %433 = vmatprep.subr.bf16.mxu0 0
      %434 = vmatpush1.bf16.msra.mxu0 0
      %435 = vmatprep.subr.bf16.mxu0 0
      %436 = vmatpush1.bf16.msra.mxu0 0
      %437 = vmatprep.subr.bf16.mxu0 0
      %438 = vmatpush1.bf16.msra.mxu0 0
      %439 = vmatprep.subr.bf16.mxu0 0
      %440 = vmatpush1.bf16.msra.mxu0 0
      %441 = vmatprep.subr.bf16.mxu0 0
      %442 = vmatpush1.bf16.msra.mxu0 0
      %443 = vmatprep.subr.bf16.mxu0 0
      %444 = vmatpush1.bf16.msra.mxu0 0
      %445 = vmatprep.subr.bf16.mxu0 0
      %446 = vmatpush1.bf16.msra.mxu0 0
      %447 = vmatprep.mubr.bf16.mxu0 0
      %448 = vmatmul.mubr.bf16.gmra.mrb[0].mxu0 %v335
      %v449 = vpop.f32.mrb[0].mxu0
      %v450 = vadd.f32 %v269, %v449
      %v451 = vpop.f32.mrb[0].mxu0
      %v452 = vpop.f32.mrb[0].mxu0
      %v453 = vadd.f32 %v269, %v452
      %v454 = vpop.f32.mrb[0].mxu0
      %455 = vmatprep.mubr.bf16.mxu0 0
      %456 = vmatmul.mubr.bf16.gmra.mrb[0].mxu0 %v336
      %v457 = vpop.f32.mrb[0].mxu0
      %v458 = vadd.f32 %v269, %v457
      %v459 = vpop.f32.mrb[0].mxu0
      %v460 = vpop.f32.mrb[0].mxu0
      %v461 = vadd.f32 %v269, %v460
      %v462 = vpop.f32.mrb[0].mxu0
      %463 = vmatprep.mubr.bf16.mxu0 0
      %464 = vmatmul.mubr.bf16.gmra.mrb[0].mxu0 %v337
      %v465 = vpop.f32.mrb[0].mxu0
      %v466 = vadd.f32 %v269, %v465
      %v467 = vpop.f32.mrb[0].mxu0
      %v468 = vpop.f32.mrb[0].mxu0
      %v469 = vadd.f32 %v269, %v468
      %v470 = vpop.f32.mrb[0].mxu0
      %471 = vmatprep.mubr.bf16.mxu0 0
      %472 = vmatmul.mubr.bf16.gmra.mrb[0].mxu0 %v338
      %v473 = vpop.f32.mrb[0].mxu0
      %v474 = vadd.f32 %v269, %v473
      %v475 = vpop.f32.mrb[0].mxu0
      %v476 = vpop.f32.mrb[0].mxu0
      %v477 = vadd.f32 %v269, %v476
      %v478 = vpop.f32.mrb[0].mxu0
      %479 = vmatprep.mubr.bf16.mxu0 0
      %480 = vmatmul.mubr.bf16.gmra.mrb[0].mxu0 %v339
      %v481 = vpop.f32.mrb[0].mxu0
      %v482 = vadd.f32 %v269, %v481
      %v483 = vpop.f32.mrb[0].mxu0
      %v484 = vpop.f32.mrb[0].mxu0
      %v485 = vadd.f32 %v269, %v484
      %v486 = vpop.f32.mrb[0].mxu0
      %487 = vmatprep.mubr.bf16.mxu0 0
      %488 = vmatmul.mubr.bf16.gmra.mrb[0].mxu0 %v340
      %v489 = vpop.f32.mrb[0].mxu0
      %v490 = vadd.f32 %v269, %v489
      %v491 = vpop.f32.mrb[0].mxu0
      %v492 = vpop.f32.mrb[0].mxu0
      %v493 = vadd.f32 %v269, %v492
      %v494 = vpop.f32.mrb[0].mxu0
      %495 = vmatprep.mubr.bf16.mxu0 0
      %496 = vmatmul.mubr.bf16.gmra.mrb[0].mxu0 %v341
      %v497 = vpop.f32.mrb[0].mxu0
      %v498 = vadd.f32 %v269, %v497
      %v499 = vpop.f32.mrb[0].mxu0
      %v500 = vpop.f32.mrb[0].mxu0
      %v501 = vadd.f32 %v269, %v500
      %v502 = vpop.f32.mrb[0].mxu0
      %503 = vmatprep.mubr.bf16.mxu0 0
      %504 = vmatmul.mubr.bf16.gmra.mrb[0].mxu0 %v342
      %v505 = vpop.f32.mrb[0].mxu0
      %v506 = vadd.f32 %v269, %v505
      %v507 = vpop.f32.mrb[0].mxu0
      %v508 = vpop.f32.mrb[0].mxu0
      %v509 = vadd.f32 %v269, %v508
      %v510 = vpop.f32.mrb[0].mxu0
      %511 = vmatprep.mubr.bf16.mxu0 0
      %512 = vmatmul.mubr.bf16.gmra.mrb[0].mxu0 %v343
      %v513 = vpop.f32.mrb[0].mxu0
      %v514 = vadd.f32 %v269, %v513
      %v515 = vpop.f32.mrb[0].mxu0
      %v516 = vpop.f32.mrb[0].mxu0
      %v517 = vadd.f32 %v269, %v516
      %v518 = vpop.f32.mrb[0].mxu0
      %519 = vmatprep.mubr.bf16.mxu0 0
      %520 = vmatmul.mubr.bf16.gmra.mrb[0].mxu0 %v344
      %v521 = vpop.f32.mrb[0].mxu0
      %v522 = vadd.f32 %v269, %v521
      %v523 = vpop.f32.mrb[0].mxu0
      %v524 = vpop.f32.mrb[0].mxu0
      %v525 = vadd.f32 %v269, %v524
      %v526 = vpop.f32.mrb[0].mxu0
      %527 = vmatprep.mubr.bf16.mxu0 0
      %528 = vmatmul.mubr.bf16.gmra.mrb[0].mxu0 %v345
      %v529 = vpop.f32.mrb[0].mxu0
      %v530 = vadd.f32 %v269, %v529
      %v531 = vpop.f32.mrb[0].mxu0
      %v532 = vpop.f32.mrb[0].mxu0
      %v533 = vadd.f32 %v269, %v532
      %v534 = vpop.f32.mrb[0].mxu0
      %535 = vmatprep.mubr.bf16.mxu0 0
      %536 = vmatmul.mubr.bf16.gmra.mrb[0].mxu0 %v346
      %v537 = vpop.f32.mrb[0].mxu0
      %v538 = vadd.f32 %v269, %v537
      %v539 = vpop.f32.mrb[0].mxu0
      %v540 = vpop.f32.mrb[0].mxu0
      %v541 = vadd.f32 %v269, %v540
      %v542 = vpop.f32.mrb[0].mxu0
      %543 = vmatprep.mubr.bf16.mxu0 0
      %544 = vmatmul.mubr.bf16.gmra.mrb[0].mxu0 %v347
      %v545 = vpop.f32.mrb[0].mxu0
      %v546 = vadd.f32 %v269, %v545
      %v547 = vpop.f32.mrb[0].mxu0
      %v548 = vpop.f32.mrb[0].mxu0
      %v549 = vadd.f32 %v269, %v548
      %v550 = vpop.f32.mrb[0].mxu0
      %551 = vmatprep.mubr.bf16.mxu0 0
      %552 = vmatmul.mubr.bf16.gmra.mrb[0].mxu0 %v348
      %v553 = vpop.f32.mrb[0].mxu0
      %v554 = vadd.f32 %v269, %v553
      %v555 = vpop.f32.mrb[0].mxu0
      %v556 = vpop.f32.mrb[0].mxu0
      %v557 = vadd.f32 %v269, %v556
      %v558 = vpop.f32.mrb[0].mxu0
      %559 = vmatprep.mubr.bf16.mxu0 0
      %560 = vmatmul.mubr.bf16.gmra.mrb[0].mxu0 %v349
      %v561 = vpop.f32.mrb[0].mxu0
      %v562 = vadd.f32 %v269, %v561
      %v563 = vpop.f32.mrb[0].mxu0
      %v564 = vpop.f32.mrb[0].mxu0
      %v565 = vadd.f32 %v269, %v564
      %v566 = vpop.f32.mrb[0].mxu0
      %567 = vmatprep.mubr.bf16.mxu0 0
      %568 = vmatmul.mubr.bf16.gmra.mrb[0].mxu0 %v350
      %v569 = vpop.f32.mrb[0].mxu0
      %v570 = vadd.f32 %v269, %v569
      %v571 = vpop.f32.mrb[0].mxu0
      %v572 = vpop.f32.mrb[0].mxu0
      %v573 = vadd.f32 %v269, %v572
      %v574 = vpop.f32.mrb[0].mxu0
      %575 = vdwg.mxu0
      %v576 = vmax.f32 %v450, 0.0
      %v577 = vmax.f32 %v453, 0.0
      %v578 = vmax.f32 %v458, 0.0
      %v579 = vmax.f32 %v461, 0.0
      %v580 = vmax.f32 %v466, 0.0
      %v581 = vmax.f32 %v469, 0.0
      %v582 = vmax.f32 %v474, 0.0
      %v583 = vmax.f32 %v477, 0.0
      %v584 = vmax.f32 %v482, 0.0
      %v585 = vmax.f32 %v485, 0.0
      %v586 = vmax.f32 %v490, 0.0
      %v587 = vmax.f32 %v493, 0.0
      %v588 = vmax.f32 %v498, 0.0
      %v589 = vmax.f32 %v501, 0.0
      %v590 = vmax.f32 %v506, 0.0
      %v591 = vmax.f32 %v509, 0.0
      %v592 = vmax.f32 %v514, 0.0
      %v593 = vmax.f32 %v517, 0.0
      %v594 = vmax.f32 %v522, 0.0
      %v595 = vmax.f32 %v525, 0.0
      %v596 = vmax.f32 %v530, 0.0
      %v597 = vmax.f32 %v533, 0.0
      %v598 = vmax.f32 %v538, 0.0
      %v599 = vmax.f32 %v541, 0.0
      %v600 = vmax.f32 %v546, 0.0
      %v601 = vmax.f32 %v549, 0.0
      %v602 = vmax.f32 %v554, 0.0
      %v603 = vmax.f32 %v557, 0.0
      %v604 = vmax.f32 %v562, 0.0
      %v605 = vmax.f32 %v565, 0.0
      %v606 = vmax.f32 %v570, 0.0
      %v607 = vmax.f32 %v573, 0.0
      %v608 = vpack.c.bf16 %v577, %v576
      %v609 = vpack.c.bf16 %v579, %v578
      %v610 = vpack.c.bf16 %v581, %v580
      %v611 = vpack.c.bf16 %v583, %v582
      %v612 = vpack.c.bf16 %v585, %v584
      %v613 = vpack.c.bf16 %v587, %v586
      %v614 = vpack.c.bf16 %v589, %v588
      %v615 = vpack.c.bf16 %v591, %v590
      %v616 = vpack.c.bf16 %v593, %v592
      %v617 = vpack.c.bf16 %v595, %v594
      %v618 = vpack.c.bf16 %v597, %v596
      %v619 = vpack.c.bf16 %v599, %v598
      %v620 = vpack.c.bf16 %v601, %v600
      %v621 = vpack.c.bf16 %v603, %v602
      %v622 = vpack.c.bf16 %v605, %v604
      %v623 = vpack.c.bf16 %v607, %v606
      %s624 = scalar_lea.vmem %s1, 64
      %v625 = vld [vmem:[%s624] sm:$0xf]
      %v626 = vld [vmem:[%s624 + $0x4] sm:$0xf]
      %v627 = vld [vmem:[%s624 + $0x8] sm:$0xf]
      %v628 = vld [vmem:[%s624 + $0xc] sm:$0xf]
      %v629 = vld [vmem:[%s624 + $0x10] sm:$0xf]
      %v630 = vld [vmem:[%s624 + $0x14] sm:$0xf]
      %v631 = vld [vmem:[%s624 + $0x18] sm:$0xf]
      %v632 = vld [vmem:[%s624 + $0x1c] sm:$0xf]
      %v633 = vld [vmem:[%s624 + $0x20] sm:$0xf]
      %v634 = vld [vmem:[%s624 + $0x24] sm:$0xf]
      %v635 = vld [vmem:[%s624 + $0x28] sm:$0xf]
      %v636 = vld [vmem:[%s624 + $0x2c] sm:$0xf]
      %v637 = vld [vmem:[%s624 + $0x30] sm:$0xf]
      %v638 = vld [vmem:[%s624 + $0x34] sm:$0xf]
      %v639 = vld [vmem:[%s624 + $0x38] sm:$0xf]
      %v640 = vld [vmem:[%s624 + $0x3c] sm:$0xf]
      %s641 = scalar_lea.vmem %s2, 1
      %v642 = vld [vmem:[%s641] sm:$0x1]
      %v644 = vlaneseq
      %v645 = vshrl.u32 %v644, 7
      %v646 = vsub.s32 0, %v645
      %v647 = vrot.slane %v642, %v646
      %v665 = vunpack.c.l.b16 %v625
      %v666 = vunpack.c.l.b16 %v626
      %v667 = vunpack.c.l.b16 %v627
      %v668 = vunpack.c.l.b16 %v628
      %v669 = vunpack.c.l.b16 %v629
      %v670 = vunpack.c.l.b16 %v630
      %v671 = vunpack.c.l.b16 %v631
      %v672 = vunpack.c.l.b16 %v632
      %v673 = vunpack.c.l.b16 %v633
      %v674 = vunpack.c.l.b16 %v634
      %v675 = vunpack.c.l.b16 %v635
      %v676 = vunpack.c.l.b16 %v636
      %v677 = vunpack.c.l.b16 %v637
      %v678 = vunpack.c.l.b16 %v638
      %v679 = vunpack.c.l.b16 %v639
      %v680 = vunpack.c.l.b16 %v640
      %v681 = vpack.c.b16 %v666, %v665
      %v682 = vpack.c.b16 %v668, %v667
      %v683 = vpack.c.b16 %v670, %v669
      %v684 = vpack.c.b16 %v672, %v671
      %v685 = vpack.c.b16 %v674, %v673
      %v686 = vpack.c.b16 %v676, %v675
      %v687 = vpack.c.b16 %v678, %v677
      %v688 = vpack.c.b16 %v680, %v679
      %697 = vmatprep.subr.bf16.mxu0 0
      %698 = vmatpush1.bf16.msra.mxu0 %v681
      %699 = vmatprep.subr.bf16.mxu0 0
      %700 = vmatpush1.bf16.msra.mxu0 %v682
      %701 = vmatprep.subr.bf16.mxu0 0
      %702 = vmatpush1.bf16.msra.mxu0 %v683
      %703 = vmatprep.subr.bf16.mxu0 0
      %704 = vmatpush1.bf16.msra.mxu0 %v684
      %705 = vmatprep.subr.bf16.mxu0 0
      %706 = vmatpush1.bf16.msra.mxu0 %v685
      %707 = vmatprep.subr.bf16.mxu0 0
      %708 = vmatpush1.bf16.msra.mxu0 %v686
      %709 = vmatprep.subr.bf16.mxu0 0
      %710 = vmatpush1.bf16.msra.mxu0 %v687
      %711 = vmatprep.subr.bf16.mxu0 0
      %712 = vmatpush1.bf16.msra.mxu0 %v688
      %713 = vmatprep.subr.bf16.mxu0 0
      %714 = vmatpush1.bf16.msra.mxu0 0
      %715 = vmatprep.subr.bf16.mxu0 0
      %716 = vmatpush1.bf16.msra.mxu0 0
      %717 = vmatprep.subr.bf16.mxu0 0
      %718 = vmatpush1.bf16.msra.mxu0 0
      %719 = vmatprep.subr.bf16.mxu0 0
      %720 = vmatpush1.bf16.msra.mxu0 0
      %721 = vmatprep.subr.bf16.mxu0 0
      %722 = vmatpush1.bf16.msra.mxu0 0
      %723 = vmatprep.subr.bf16.mxu0 0
      %724 = vmatpush1.bf16.msra.mxu0 0
      %725 = vmatprep.subr.bf16.mxu0 0
      %726 = vmatpush1.bf16.msra.mxu0 0
      %727 = vmatprep.subr.bf16.mxu0 0
      %728 = vmatpush1.bf16.msra.mxu0 0
      %729 = vmatprep.mubr.bf16.mxu0 0
      %730 = vmatmul.mubr.bf16.gmra.mrb[0].mxu0 %v608
      %v731 = vpop.f32.mrb[0].mxu0
      %v732 = vadd.f32 %v647, %v731
      %v733 = vpop.f32.mrb[0].mxu0
      %v734 = vpop.f32.mrb[0].mxu0
      %v735 = vadd.f32 %v647, %v734
      %v736 = vpop.f32.mrb[0].mxu0
      %737 = vmatprep.mubr.bf16.mxu0 0
      %738 = vmatmul.mubr.bf16.gmra.mrb[0].mxu0 %v609
      %v739 = vpop.f32.mrb[0].mxu0
      %v740 = vadd.f32 %v647, %v739
      %v741 = vpop.f32.mrb[0].mxu0
      %v742 = vpop.f32.mrb[0].mxu0
      %v743 = vadd.f32 %v647, %v742
      %v744 = vpop.f32.mrb[0].mxu0
      %745 = vmatprep.mubr.bf16.mxu0 0
      %746 = vmatmul.mubr.bf16.gmra.mrb[0].mxu0 %v610
      %v747 = vpop.f32.mrb[0].mxu0
      %v748 = vadd.f32 %v647, %v747
      %v749 = vpop.f32.mrb[0].mxu0
      %v750 = vpop.f32.mrb[0].mxu0
      %v751 = vadd.f32 %v647, %v750
      %v752 = vpop.f32.mrb[0].mxu0
      %753 = vmatprep.mubr.bf16.mxu0 0
      %754 = vmatmul.mubr.bf16.gmra.mrb[0].mxu0 %v611
      %v755 = vpop.f32.mrb[0].mxu0
      %v756 = vadd.f32 %v647, %v755
      %v757 = vpop.f32.mrb[0].mxu0
      %v758 = vpop.f32.mrb[0].mxu0
      %v759 = vadd.f32 %v647, %v758
      %v760 = vpop.f32.mrb[0].mxu0
      %761 = vmatprep.mubr.bf16.mxu0 0
      %762 = vmatmul.mubr.bf16.gmra.mrb[0].mxu0 %v612
      %v763 = vpop.f32.mrb[0].mxu0
      %v764 = vadd.f32 %v647, %v763
      %v765 = vpop.f32.mrb[0].mxu0
      %v766 = vpop.f32.mrb[0].mxu0
      %v767 = vadd.f32 %v647, %v766
      %v768 = vpop.f32.mrb[0].mxu0
      %769 = vmatprep.mubr.bf16.mxu0 0
      %770 = vmatmul.mubr.bf16.gmra.mrb[0].mxu0 %v613
      %v771 = vpop.f32.mrb[0].mxu0
      %v772 = vadd.f32 %v647, %v771
      %v773 = vpop.f32.mrb[0].mxu0
      %v774 = vpop.f32.mrb[0].mxu0
      %v775 = vadd.f32 %v647, %v774
      %v776 = vpop.f32.mrb[0].mxu0
      %777 = vmatprep.mubr.bf16.mxu0 0
      %778 = vmatmul.mubr.bf16.gmra.mrb[0].mxu0 %v614
      %v779 = vpop.f32.mrb[0].mxu0
      %v780 = vadd.f32 %v647, %v779
      %v781 = vpop.f32.mrb[0].mxu0
      %v782 = vpop.f32.mrb[0].mxu0
      %v783 = vadd.f32 %v647, %v782
      %v784 = vpop.f32.mrb[0].mxu0
      %785 = vmatprep.mubr.bf16.mxu0 0
      %786 = vmatmul.mubr.bf16.gmra.mrb[0].mxu0 %v615
      %v787 = vpop.f32.mrb[0].mxu0
      %v788 = vadd.f32 %v647, %v787
      %v789 = vpop.f32.mrb[0].mxu0
      %v790 = vpop.f32.mrb[0].mxu0
      %v791 = vadd.f32 %v647, %v790
      %v792 = vpop.f32.mrb[0].mxu0
      %793 = vmatprep.mubr.bf16.mxu0 0
      %794 = vmatmul.mubr.bf16.gmra.mrb[0].mxu0 %v616
      %v795 = vpop.f32.mrb[0].mxu0
      %v796 = vadd.f32 %v647, %v795
      %v797 = vpop.f32.mrb[0].mxu0
      %v798 = vpop.f32.mrb[0].mxu0
      %v799 = vadd.f32 %v647, %v798
      %v800 = vpop.f32.mrb[0].mxu0
      %801 = vmatprep.mubr.bf16.mxu0 0
      %802 = vmatmul.mubr.bf16.gmra.mrb[0].mxu0 %v617
      %v803 = vpop.f32.mrb[0].mxu0
      %v804 = vadd.f32 %v647, %v803
      %v805 = vpop.f32.mrb[0].mxu0
      %v806 = vpop.f32.mrb[0].mxu0
      %v807 = vadd.f32 %v647, %v806
      %v808 = vpop.f32.mrb[0].mxu0
      %809 = vmatprep.mubr.bf16.mxu0 0
      %810 = vmatmul.mubr.bf16.gmra.mrb[0].mxu0 %v618
      %v811 = vpop.f32.mrb[0].mxu0
      %v812 = vadd.f32 %v647, %v811
      %v813 = vpop.f32.mrb[0].mxu0
      %v814 = vpop.f32.mrb[0].mxu0
      %v815 = vadd.f32 %v647, %v814
      %v816 = vpop.f32.mrb[0].mxu0
      %817 = vmatprep.mubr.bf16.mxu0 0
      %818 = vmatmul.mubr.bf16.gmra.mrb[0].mxu0 %v619
      %v819 = vpop.f32.mrb[0].mxu0
      %v820 = vadd.f32 %v647, %v819
      %v821 = vpop.f32.mrb[0].mxu0
      %v822 = vpop.f32.mrb[0].mxu0
      %v823 = vadd.f32 %v647, %v822
      %v824 = vpop.f32.mrb[0].mxu0
      %825 = vmatprep.mubr.bf16.mxu0 0
      %826 = vmatmul.mubr.bf16.gmra.mrb[0].mxu0 %v620
      %v827 = vpop.f32.mrb[0].mxu0
      %v828 = vadd.f32 %v647, %v827
      %v829 = vpop.f32.mrb[0].mxu0
      %v830 = vpop.f32.mrb[0].mxu0
      %v831 = vadd.f32 %v647, %v830
      %v832 = vpop.f32.mrb[0].mxu0
      %833 = vmatprep.mubr.bf16.mxu0 0
      %834 = vmatmul.mubr.bf16.gmra.mrb[0].mxu0 %v621
      %v835 = vpop.f32.mrb[0].mxu0
      %v836 = vadd.f32 %v647, %v835
      %v837 = vpop.f32.mrb[0].mxu0
      %v838 = vpop.f32.mrb[0].mxu0
      %v839 = vadd.f32 %v647, %v838
      %v840 = vpop.f32.mrb[0].mxu0
      %841 = vmatprep.mubr.bf16.mxu0 0
      %842 = vmatmul.mubr.bf16.gmra.mrb[0].mxu0 %v622
      %v843 = vpop.f32.mrb[0].mxu0
      %v844 = vadd.f32 %v647, %v843
      %v845 = vpop.f32.mrb[0].mxu0
      %v846 = vpop.f32.mrb[0].mxu0
      %v847 = vadd.f32 %v647, %v846
      %v848 = vpop.f32.mrb[0].mxu0
      %849 = vmatprep.mubr.bf16.mxu0 0
      %850 = vmatmul.mubr.bf16.gmra.mrb[0].mxu0 %v623
      %v851 = vpop.f32.mrb[0].mxu0
      %v852 = vadd.f32 %v647, %v851
      %v853 = vpop.f32.mrb[0].mxu0
      %v854 = vpop.f32.mrb[0].mxu0
      %v855 = vadd.f32 %v647, %v854
      %v856 = vpop.f32.mrb[0].mxu0
      %857 = vdwg.mxu0
      %v858 = vmax.f32 %v732, 0.0
      %v859 = vmax.f32 %v735, 0.0
      %v860 = vmax.f32 %v740, 0.0
      %v861 = vmax.f32 %v743, 0.0
      %v862 = vmax.f32 %v748, 0.0
      %v863 = vmax.f32 %v751, 0.0
      %v864 = vmax.f32 %v756, 0.0
      %v865 = vmax.f32 %v759, 0.0
      %v866 = vmax.f32 %v764, 0.0
      %v867 = vmax.f32 %v767, 0.0
      %v868 = vmax.f32 %v772, 0.0
      %v869 = vmax.f32 %v775, 0.0
      %v870 = vmax.f32 %v780, 0.0
      %v871 = vmax.f32 %v783, 0.0
      %v872 = vmax.f32 %v788, 0.0
      %v873 = vmax.f32 %v791, 0.0
      %v874 = vmax.f32 %v796, 0.0
      %v875 = vmax.f32 %v799, 0.0
      %v876 = vmax.f32 %v804, 0.0
      %v877 = vmax.f32 %v807, 0.0
      %v878 = vmax.f32 %v812, 0.0
      %v879 = vmax.f32 %v815, 0.0
      %v880 = vmax.f32 %v820, 0.0
      %v881 = vmax.f32 %v823, 0.0
      %v882 = vmax.f32 %v828, 0.0
      %v883 = vmax.f32 %v831, 0.0
      %v884 = vmax.f32 %v836, 0.0
      %v885 = vmax.f32 %v839, 0.0
      %v886 = vmax.f32 %v844, 0.0
      %v887 = vmax.f32 %v847, 0.0
      %v888 = vmax.f32 %v852, 0.0
      %v889 = vmax.f32 %v855, 0.0
      %v890 = vpack.c.bf16 %v859, %v858
      %v891 = vpack.c.bf16 %v861, %v860
      %v892 = vpack.c.bf16 %v863, %v862
      %v893 = vpack.c.bf16 %v865, %v864
      %v894 = vpack.c.bf16 %v867, %v866
      %v895 = vpack.c.bf16 %v869, %v868
      %v896 = vpack.c.bf16 %v871, %v870
      %v897 = vpack.c.bf16 %v873, %v872
      %v898 = vpack.c.bf16 %v875, %v874
      %v899 = vpack.c.bf16 %v877, %v876
      %v900 = vpack.c.bf16 %v879, %v878
      %v901 = vpack.c.bf16 %v881, %v880
      %v902 = vpack.c.bf16 %v883, %v882
      %v903 = vpack.c.bf16 %v885, %v884
      %v904 = vpack.c.bf16 %v887, %v886
      %v905 = vpack.c.bf16 %v889, %v888
      %s906 = scalar_lea.vmem %s1, 128
      %v907 = vld [vmem:[%s906] sm:$0xf]
      %v908 = vld [vmem:[%s906 + $0x4] sm:$0xf]
      %v909 = vld [vmem:[%s906 + $0x8] sm:$0xf]
      %v910 = vld [vmem:[%s906 + $0xc] sm:$0xf]
      %v911 = vld [vmem:[%s906 + $0x10] sm:$0xf]
      %v912 = vld [vmem:[%s906 + $0x14] sm:$0xf]
      %v913 = vld [vmem:[%s906 + $0x18] sm:$0xf]
      %v914 = vld [vmem:[%s906 + $0x1c] sm:$0xf]
      %v915 = vld [vmem:[%s906 + $0x20] sm:$0xf]
      %v916 = vld [vmem:[%s906 + $0x24] sm:$0xf]
      %v917 = vld [vmem:[%s906 + $0x28] sm:$0xf]
      %v918 = vld [vmem:[%s906 + $0x2c] sm:$0xf]
      %v919 = vld [vmem:[%s906 + $0x30] sm:$0xf]
      %v920 = vld [vmem:[%s906 + $0x34] sm:$0xf]
      %v921 = vld [vmem:[%s906 + $0x38] sm:$0xf]
      %v922 = vld [vmem:[%s906 + $0x3c] sm:$0xf]
      %s923 = scalar_lea.vmem %s2, 2
      %v924 = vld [vmem:[%s923] sm:$0x1]
      %v926 = vlaneseq
      %v927 = vshrl.u32 %v926, 7
      %v928 = vsub.s32 0, %v927
      %v929 = vrot.slane %v924, %v928
      %v947 = vunpack.c.l.b16 %v907
      %v948 = vunpack.c.l.b16 %v908
      %v949 = vunpack.c.l.b16 %v909
      %v950 = vunpack.c.l.b16 %v910
      %v951 = vunpack.c.l.b16 %v911
      %v952 = vunpack.c.l.b16 %v912
      %v953 = vunpack.c.l.b16 %v913
      %v954 = vunpack.c.l.b16 %v914
      %v955 = vunpack.c.l.b16 %v915
      %v956 = vunpack.c.l.b16 %v916
      %v957 = vunpack.c.l.b16 %v917
      %v958 = vunpack.c.l.b16 %v918
      %v959 = vunpack.c.l.b16 %v919
      %v960 = vunpack.c.l.b16 %v920
      %v961 = vunpack.c.l.b16 %v921
      %v962 = vunpack.c.l.b16 %v922
      %v963 = vpack.c.b16 %v948, %v947
      %v964 = vpack.c.b16 %v950, %v949
      %v965 = vpack.c.b16 %v952, %v951
      %v966 = vpack.c.b16 %v954, %v953
      %v967 = vpack.c.b16 %v956, %v955
      %v968 = vpack.c.b16 %v958, %v957
      %v969 = vpack.c.b16 %v960, %v959
      %v970 = vpack.c.b16 %v962, %v961
      %979 = vmatprep.subr.bf16.mxu0 0
      %980 = vmatpush1.bf16.msra.mxu0 %v963
      %981 = vmatprep.subr.bf16.mxu0 0
      %982 = vmatpush1.bf16.msra.mxu0 %v964
      %983 = vmatprep.subr.bf16.mxu0 0
      %984 = vmatpush1.bf16.msra.mxu0 %v965
      %985 = vmatprep.subr.bf16.mxu0 0
      %986 = vmatpush1.bf16.msra.mxu0 %v966
      %987 = vmatprep.subr.bf16.mxu0 0
      %988 = vmatpush1.bf16.msra.mxu0 %v967
      %989 = vmatprep.subr.bf16.mxu0 0
      %990 = vmatpush1.bf16.msra.mxu0 %v968
      %991 = vmatprep.subr.bf16.mxu0 0
      %992 = vmatpush1.bf16.msra.mxu0 %v969
      %993 = vmatprep.subr.bf16.mxu0 0
      %994 = vmatpush1.bf16.msra.mxu0 %v970
      %995 = vmatprep.subr.bf16.mxu0 0
      %996 = vmatpush1.bf16.msra.mxu0 0
      %997 = vmatprep.subr.bf16.mxu0 0
      %998 = vmatpush1.bf16.msra.mxu0 0
      %999 = vmatprep.subr.bf16.mxu0 0
      %1000 = vmatpush1.bf16.msra.mxu0 0
      %1001 = vmatprep.subr.bf16.mxu0 0
      %1002 = vmatpush1.bf16.msra.mxu0 0
      %1003 = vmatprep.subr.bf16.mxu0 0
      %1004 = vmatpush1.bf16.msra.mxu0 0
      %1005 = vmatprep.subr.bf16.mxu0 0
      %1006 = vmatpush1.bf16.msra.mxu0 0
      %1007 = vmatprep.subr.bf16.mxu0 0
      %1008 = vmatpush1.bf16.msra.mxu0 0
      %1009 = vmatprep.subr.bf16.mxu0 0
      %1010 = vmatpush1.bf16.msra.mxu0 0
      %1011 = vmatprep.mubr.bf16.mxu0 0
      %1012 = vmatmul.mubr.bf16.gmra.mrb[0].mxu0 %v890
      %v1013 = vpop.f32.mrb[0].mxu0
      %v1014 = vadd.f32 %v929, %v1013
      %v1015 = vpop.f32.mrb[0].mxu0
      %v1016 = vpop.f32.mrb[0].mxu0
      %v1017 = vadd.f32 %v929, %v1016
      %v1018 = vpop.f32.mrb[0].mxu0
      %1019 = vmatprep.mubr.bf16.mxu0 0
      %1020 = vmatmul.mubr.bf16.gmra.mrb[0].mxu0 %v891
      %v1021 = vpop.f32.mrb[0].mxu0
      %v1022 = vadd.f32 %v929, %v1021
      %v1023 = vpop.f32.mrb[0].mxu0
      %v1024 = vpop.f32.mrb[0].mxu0
      %v1025 = vadd.f32 %v929, %v1024
      %v1026 = vpop.f32.mrb[0].mxu0
      %1027 = vmatprep.mubr.bf16.mxu0 0
      %1028 = vmatmul.mubr.bf16.gmra.mrb[0].mxu0 %v892
      %v1029 = vpop.f32.mrb[0].mxu0
      %v1030 = vadd.f32 %v929, %v1029
      %v1031 = vpop.f32.mrb[0].mxu0
      %v1032 = vpop.f32.mrb[0].mxu0
      %v1033 = vadd.f32 %v929, %v1032
      %v1034 = vpop.f32.mrb[0].mxu0
      %1035 = vmatprep.mubr.bf16.mxu0 0
      %1036 = vmatmul.mubr.bf16.gmra.mrb[0].mxu0 %v893
      %v1037 = vpop.f32.mrb[0].mxu0
      %v1038 = vadd.f32 %v929, %v1037
      %v1039 = vpop.f32.mrb[0].mxu0
      %v1040 = vpop.f32.mrb[0].mxu0
      %v1041 = vadd.f32 %v929, %v1040
      %v1042 = vpop.f32.mrb[0].mxu0
      %1043 = vmatprep.mubr.bf16.mxu0 0
      %1044 = vmatmul.mubr.bf16.gmra.mrb[0].mxu0 %v894
      %v1045 = vpop.f32.mrb[0].mxu0
      %v1046 = vadd.f32 %v929, %v1045
      %v1047 = vpop.f32.mrb[0].mxu0
      %v1048 = vpop.f32.mrb[0].mxu0
      %v1049 = vadd.f32 %v929, %v1048
      %v1050 = vpop.f32.mrb[0].mxu0
      %1051 = vmatprep.mubr.bf16.mxu0 0
      %1052 = vmatmul.mubr.bf16.gmra.mrb[0].mxu0 %v895
      %v1053 = vpop.f32.mrb[0].mxu0
      %v1054 = vadd.f32 %v929, %v1053
      %v1055 = vpop.f32.mrb[0].mxu0
      %v1056 = vpop.f32.mrb[0].mxu0
      %v1057 = vadd.f32 %v929, %v1056
      %v1058 = vpop.f32.mrb[0].mxu0
      %1059 = vmatprep.mubr.bf16.mxu0 0
      %1060 = vmatmul.mubr.bf16.gmra.mrb[0].mxu0 %v896
      %v1061 = vpop.f32.mrb[0].mxu0
      %v1062 = vadd.f32 %v929, %v1061
      %v1063 = vpop.f32.mrb[0].mxu0
      %v1064 = vpop.f32.mrb[0].mxu0
      %v1065 = vadd.f32 %v929, %v1064
      %v1066 = vpop.f32.mrb[0].mxu0
      %1067 = vmatprep.mubr.bf16.mxu0 0
      %1068 = vmatmul.mubr.bf16.gmra.mrb[0].mxu0 %v897
      %v1069 = vpop.f32.mrb[0].mxu0
      %v1070 = vadd.f32 %v929, %v1069
      %v1071 = vpop.f32.mrb[0].mxu0
      %v1072 = vpop.f32.mrb[0].mxu0
      %v1073 = vadd.f32 %v929, %v1072
      %v1074 = vpop.f32.mrb[0].mxu0
      %1075 = vmatprep.mubr.bf16.mxu0 0
      %1076 = vmatmul.mubr.bf16.gmra.mrb[0].mxu0 %v898
      %v1077 = vpop.f32.mrb[0].mxu0
      %v1078 = vadd.f32 %v929, %v1077
      %v1079 = vpop.f32.mrb[0].mxu0
      %v1080 = vpop.f32.mrb[0].mxu0
      %v1081 = vadd.f32 %v929, %v1080
      %v1082 = vpop.f32.mrb[0].mxu0
      %1083 = vmatprep.mubr.bf16.mxu0 0
      %1084 = vmatmul.mubr.bf16.gmra.mrb[0].mxu0 %v899
      %v1085 = vpop.f32.mrb[0].mxu0
      %v1086 = vadd.f32 %v929, %v1085
      %v1087 = vpop.f32.mrb[0].mxu0
      %v1088 = vpop.f32.mrb[0].mxu0
      %v1089 = vadd.f32 %v929, %v1088
      %v1090 = vpop.f32.mrb[0].mxu0
      %1091 = vmatprep.mubr.bf16.mxu0 0
      %1092 = vmatmul.mubr.bf16.gmra.mrb[0].mxu0 %v900
      %v1093 = vpop.f32.mrb[0].mxu0
      %v1094 = vadd.f32 %v929, %v1093
      %v1095 = vpop.f32.mrb[0].mxu0
      %v1096 = vpop.f32.mrb[0].mxu0
      %v1097 = vadd.f32 %v929, %v1096
      %v1098 = vpop.f32.mrb[0].mxu0
      %1099 = vmatprep.mubr.bf16.mxu0 0
      %1100 = vmatmul.mubr.bf16.gmra.mrb[0].mxu0 %v901
      %v1101 = vpop.f32.mrb[0].mxu0
      %v1102 = vadd.f32 %v929, %v1101
      %v1103 = vpop.f32.mrb[0].mxu0
      %v1104 = vpop.f32.mrb[0].mxu0
      %v1105 = vadd.f32 %v929, %v1104
      %v1106 = vpop.f32.mrb[0].mxu0
      %1107 = vmatprep.mubr.bf16.mxu0 0
      %1108 = vmatmul.mubr.bf16.gmra.mrb[0].mxu0 %v902
      %v1109 = vpop.f32.mrb[0].mxu0
      %v1110 = vadd.f32 %v929, %v1109
      %v1111 = vpop.f32.mrb[0].mxu0
      %v1112 = vpop.f32.mrb[0].mxu0
      %v1113 = vadd.f32 %v929, %v1112
      %v1114 = vpop.f32.mrb[0].mxu0
      %1115 = vmatprep.mubr.bf16.mxu0 0
      %1116 = vmatmul.mubr.bf16.gmra.mrb[0].mxu0 %v903
      %v1117 = vpop.f32.mrb[0].mxu0
      %v1118 = vadd.f32 %v929, %v1117
      %v1119 = vpop.f32.mrb[0].mxu0
      %v1120 = vpop.f32.mrb[0].mxu0
      %v1121 = vadd.f32 %v929, %v1120
      %v1122 = vpop.f32.mrb[0].mxu0
      %1123 = vmatprep.mubr.bf16.mxu0 0
      %1124 = vmatmul.mubr.bf16.gmra.mrb[0].mxu0 %v904
      %v1125 = vpop.f32.mrb[0].mxu0
      %v1126 = vadd.f32 %v929, %v1125
      %v1127 = vpop.f32.mrb[0].mxu0
      %v1128 = vpop.f32.mrb[0].mxu0
      %v1129 = vadd.f32 %v929, %v1128
      %v1130 = vpop.f32.mrb[0].mxu0
      %1131 = vmatprep.mubr.bf16.mxu0 0
      %1132 = vmatmul.mubr.bf16.gmra.mrb[0].mxu0 %v905
      %v1133 = vpop.f32.mrb[0].mxu0
      %v1134 = vadd.f32 %v929, %v1133
      %v1135 = vpop.f32.mrb[0].mxu0
      %v1136 = vpop.f32.mrb[0].mxu0
      %v1137 = vadd.f32 %v929, %v1136
      %v1138 = vpop.f32.mrb[0].mxu0
      %1139 = vdwg.mxu0
      %1140 = vst [vmem:[%s207] sm:$0xff] %v1014
      %1141 = vst [vmem:[%s207 + $0x8] sm:$0xff] %v1017
      %1142 = vst [vmem:[%s207 + $0x10] sm:$0xff] %v1022
      %1143 = vst [vmem:[%s207 + $0x18] sm:$0xff] %v1025
      %1144 = vst [vmem:[%s207 + $0x20] sm:$0xff] %v1030
      %1145 = vst [vmem:[%s207 + $0x28] sm:$0xff] %v1033
      %1146 = vst [vmem:[%s207 + $0x30] sm:$0xff] %v1038
      %1147 = vst [vmem:[%s207 + $0x38] sm:$0xff] %v1041
      %1148 = vst [vmem:[%s207 + $0x40] sm:$0xff] %v1046
      %1149 = vst [vmem:[%s207 + $0x48] sm:$0xff] %v1049
      %1150 = vst [vmem:[%s207 + $0x50] sm:$0xff] %v1054
      %1151 = vst [vmem:[%s207 + $0x58] sm:$0xff] %v1057
      %1152 = vst [vmem:[%s207 + $0x60] sm:$0xff] %v1062
      %1153 = vst [vmem:[%s207 + $0x68] sm:$0xff] %v1065
      %1154 = vst [vmem:[%s207 + $0x70] sm:$0xff] %v1070
      %1155 = vst [vmem:[%s207 + $0x78] sm:$0xff] %v1073
      %1156 = vst [vmem:[%s207 + $0x80] sm:$0xff] %v1078
      %1157 = vst [vmem:[%s207 + $0x88] sm:$0xff] %v1081
      %1158 = vst [vmem:[%s207 + $0x90] sm:$0xff] %v1086
      %1159 = vst [vmem:[%s207 + $0x98] sm:$0xff] %v1089
      %1160 = vst [vmem:[%s207 + $0xa0] sm:$0xff] %v1094
      %1161 = vst [vmem:[%s207 + $0xa8] sm:$0xff] %v1097
      %1162 = vst [vmem:[%s207 + $0xb0] sm:$0xff] %v1102
      %1163 = vst [vmem:[%s207 + $0xb8] sm:$0xff] %v1105
      %1164 = vst [vmem:[%s207 + $0xc0] sm:$0xff] %v1110
      %1165 = vst [vmem:[%s207 + $0xc8] sm:$0xff] %v1113
      %1166 = vst [vmem:[%s207 + $0xd0] sm:$0xff] %v1118
      %1167 = vst [vmem:[%s207 + $0xd8] sm:$0xff] %v1121
      %1168 = vst [vmem:[%s207 + $0xe0] sm:$0xff] %v1126
      %1169 = vst [vmem:[%s207 + $0xe8] sm:$0xff] %v1129
      %1170 = vst [vmem:[%s207 + $0xf0] sm:$0xff] %v1134
      %1171 = vst [vmem:[%s207 + $0xf8] sm:$0xff] %v1137
      %v1172 = vpack.c.bf16 %v1017, %v1014
      %v1173 = vpack.c.bf16 %v1025, %v1022
      %v1174 = vpack.c.bf16 %v1033, %v1030
      %v1175 = vpack.c.bf16 %v1041, %v1038
      %v1176 = vpack.c.bf16 %v1049, %v1046
      %v1177 = vpack.c.bf16 %v1057, %v1054
      %v1178 = vpack.c.bf16 %v1065, %v1062
      %v1179 = vpack.c.bf16 %v1073, %v1070
      %v1180 = vpack.c.bf16 %v1081, %v1078
      %v1181 = vpack.c.bf16 %v1089, %v1086
      %v1182 = vpack.c.bf16 %v1097, %v1094
      %v1183 = vpack.c.bf16 %v1105, %v1102
      %v1184 = vpack.c.bf16 %v1113, %v1110
      %v1185 = vpack.c.bf16 %v1121, %v1118
      %v1186 = vpack.c.bf16 %v1129, %v1126
      %v1187 = vpack.c.bf16 %v1137, %v1134
      %s1188 = scalar_lea.vmem %s1, 192
      %v1189 = vld [vmem:[%s1188] sm:$0xf]
      %v1190 = vld [vmem:[%s1188 + $0x4] sm:$0xf]
      %v1191 = vld [vmem:[%s1188 + $0x8] sm:$0xf]
      %v1192 = vld [vmem:[%s1188 + $0xc] sm:$0xf]
      %v1193 = vld [vmem:[%s1188 + $0x10] sm:$0xf]
      %v1194 = vld [vmem:[%s1188 + $0x14] sm:$0xf]
      %v1195 = vld [vmem:[%s1188 + $0x18] sm:$0xf]
      %v1196 = vld [vmem:[%s1188 + $0x1c] sm:$0xf]
      %v1197 = vld [vmem:[%s1188 + $0x20] sm:$0xf]
      %v1198 = vld [vmem:[%s1188 + $0x24] sm:$0xf]
      %v1199 = vld [vmem:[%s1188 + $0x28] sm:$0xf]
      %v1200 = vld [vmem:[%s1188 + $0x2c] sm:$0xf]
      %v1201 = vld [vmem:[%s1188 + $0x30] sm:$0xf]
      %v1202 = vld [vmem:[%s1188 + $0x34] sm:$0xf]
      %v1203 = vld [vmem:[%s1188 + $0x38] sm:$0xf]
      %v1204 = vld [vmem:[%s1188 + $0x3c] sm:$0xf]
      %s1205 = scalar_lea.vmem %s2, 3
      %v1206 = vld [vmem:[%s1205] sm:$0x1]
      %v1208 = vlaneseq
      %v1209 = vshrl.u32 %v1208, 7
      %v1210 = vsub.s32 0, %v1209
      %v1211 = vrot.slane %v1206, %v1210
      %v1229 = vunpack.c.l.b16 %v1189
      %v1230 = vunpack.c.l.b16 %v1190
      %v1231 = vunpack.c.l.b16 %v1191
      %v1232 = vunpack.c.l.b16 %v1192
      %v1233 = vunpack.c.l.b16 %v1193
      %v1234 = vunpack.c.l.b16 %v1194
      %v1235 = vunpack.c.l.b16 %v1195
      %v1236 = vunpack.c.l.b16 %v1196
      %v1237 = vunpack.c.l.b16 %v1197
      %v1238 = vunpack.c.l.b16 %v1198
      %v1239 = vunpack.c.l.b16 %v1199
      %v1240 = vunpack.c.l.b16 %v1200
      %v1241 = vunpack.c.l.b16 %v1201
      %v1242 = vunpack.c.l.b16 %v1202
      %v1243 = vunpack.c.l.b16 %v1203
      %v1244 = vunpack.c.l.b16 %v1204
      %v1245 = vpack.c.b16 %v1230, %v1229
      %v1246 = vpack.c.b16 %v1232, %v1231
      %v1247 = vpack.c.b16 %v1234, %v1233
      %v1248 = vpack.c.b16 %v1236, %v1235
      %v1249 = vpack.c.b16 %v1238, %v1237
      %v1250 = vpack.c.b16 %v1240, %v1239
      %v1251 = vpack.c.b16 %v1242, %v1241
      %v1252 = vpack.c.b16 %v1244, %v1243
      %1261 = vmatprep.subr.bf16.mxu0 0
      %1262 = vmatpush1.bf16.msra.mxu0 %v1245
      %1263 = vmatprep.subr.bf16.mxu0 0
      %1264 = vmatpush1.bf16.msra.mxu0 %v1246
      %1265 = vmatprep.subr.bf16.mxu0 0
      %1266 = vmatpush1.bf16.msra.mxu0 %v1247
      %1267 = vmatprep.subr.bf16.mxu0 0
      %1268 = vmatpush1.bf16.msra.mxu0 %v1248
      %1269 = vmatprep.subr.bf16.mxu0 0
      %1270 = vmatpush1.bf16.msra.mxu0 %v1249
      %1271 = vmatprep.subr.bf16.mxu0 0
      %1272 = vmatpush1.bf16.msra.mxu0 %v1250
      %1273 = vmatprep.subr.bf16.mxu0 0
      %1274 = vmatpush1.bf16.msra.mxu0 %v1251
      %1275 = vmatprep.subr.bf16.mxu0 0
      %1276 = vmatpush1.bf16.msra.mxu0 %v1252
      %1277 = vmatprep.subr.bf16.mxu0 0
      %1278 = vmatpush1.bf16.msra.mxu0 0
      %1279 = vmatprep.subr.bf16.mxu0 0
      %1280 = vmatpush1.bf16.msra.mxu0 0
      %1281 = vmatprep.subr.bf16.mxu0 0
      %1282 = vmatpush1.bf16.msra.mxu0 0
      %1283 = vmatprep.subr.bf16.mxu0 0
      %1284 = vmatpush1.bf16.msra.mxu0 0
      %1285 = vmatprep.subr.bf16.mxu0 0
      %1286 = vmatpush1.bf16.msra.mxu0 0
      %1287 = vmatprep.subr.bf16.mxu0 0
      %1288 = vmatpush1.bf16.msra.mxu0 0
      %1289 = vmatprep.subr.bf16.mxu0 0
      %1290 = vmatpush1.bf16.msra.mxu0 0
      %1291 = vmatprep.subr.bf16.mxu0 0
      %1292 = vmatpush1.bf16.msra.mxu0 0
      %1293 = vmatprep.mubr.bf16.mxu0 0
      %1294 = vmatmul.mubr.bf16.gmra.mrb[0].mxu0 %v1172
      %v1295 = vpop.f32.mrb[0].mxu0
      %v1296 = vadd.f32 %v1211, %v1295
      %v1297 = vpop.f32.mrb[0].mxu0
      %v1298 = vpop.f32.mrb[0].mxu0
      %v1299 = vadd.f32 %v1211, %v1298
      %v1300 = vpop.f32.mrb[0].mxu0
      %1301 = vmatprep.mubr.bf16.mxu0 0
      %1302 = vmatmul.mubr.bf16.gmra.mrb[0].mxu0 %v1173
      %v1303 = vpop.f32.mrb[0].mxu0
      %v1304 = vadd.f32 %v1211, %v1303
      %v1305 = vpop.f32.mrb[0].mxu0
      %v1306 = vpop.f32.mrb[0].mxu0
      %v1307 = vadd.f32 %v1211, %v1306
      %v1308 = vpop.f32.mrb[0].mxu0
      %1309 = vmatprep.mubr.bf16.mxu0 0
      %1310 = vmatmul.mubr.bf16.gmra.mrb[0].mxu0 %v1174
      %v1311 = vpop.f32.mrb[0].mxu0
      %v1312 = vadd.f32 %v1211, %v1311
      %v1313 = vpop.f32.mrb[0].mxu0
      %v1314 = vpop.f32.mrb[0].mxu0
      %v1315 = vadd.f32 %v1211, %v1314
      %v1316 = vpop.f32.mrb[0].mxu0
      %1317 = vmatprep.mubr.bf16.mxu0 0
      %1318 = vmatmul.mubr.bf16.gmra.mrb[0].mxu0 %v1175
      %v1319 = vpop.f32.mrb[0].mxu0
      %v1320 = vadd.f32 %v1211, %v1319
      %v1321 = vpop.f32.mrb[0].mxu0
      %v1322 = vpop.f32.mrb[0].mxu0
      %v1323 = vadd.f32 %v1211, %v1322
      %v1324 = vpop.f32.mrb[0].mxu0
      %1325 = vmatprep.mubr.bf16.mxu0 0
      %1326 = vmatmul.mubr.bf16.gmra.mrb[0].mxu0 %v1176
      %v1327 = vpop.f32.mrb[0].mxu0
      %v1328 = vadd.f32 %v1211, %v1327
      %v1329 = vpop.f32.mrb[0].mxu0
      %v1330 = vpop.f32.mrb[0].mxu0
      %v1331 = vadd.f32 %v1211, %v1330
      %v1332 = vpop.f32.mrb[0].mxu0
      %1333 = vmatprep.mubr.bf16.mxu0 0
      %1334 = vmatmul.mubr.bf16.gmra.mrb[0].mxu0 %v1177
      %v1335 = vpop.f32.mrb[0].mxu0
      %v1336 = vadd.f32 %v1211, %v1335
      %v1337 = vpop.f32.mrb[0].mxu0
      %v1338 = vpop.f32.mrb[0].mxu0
      %v1339 = vadd.f32 %v1211, %v1338
      %v1340 = vpop.f32.mrb[0].mxu0
      %1341 = vmatprep.mubr.bf16.mxu0 0
      %1342 = vmatmul.mubr.bf16.gmra.mrb[0].mxu0 %v1178
      %v1343 = vpop.f32.mrb[0].mxu0
      %v1344 = vadd.f32 %v1211, %v1343
      %v1345 = vpop.f32.mrb[0].mxu0
      %v1346 = vpop.f32.mrb[0].mxu0
      %v1347 = vadd.f32 %v1211, %v1346
      %v1348 = vpop.f32.mrb[0].mxu0
      %1349 = vmatprep.mubr.bf16.mxu0 0
      %1350 = vmatmul.mubr.bf16.gmra.mrb[0].mxu0 %v1179
      %v1351 = vpop.f32.mrb[0].mxu0
      %v1352 = vadd.f32 %v1211, %v1351
      %v1353 = vpop.f32.mrb[0].mxu0
      %v1354 = vpop.f32.mrb[0].mxu0
      %v1355 = vadd.f32 %v1211, %v1354
      %v1356 = vpop.f32.mrb[0].mxu0
      %1357 = vmatprep.mubr.bf16.mxu0 0
      %1358 = vmatmul.mubr.bf16.gmra.mrb[0].mxu0 %v1180
      %v1359 = vpop.f32.mrb[0].mxu0
      %v1360 = vadd.f32 %v1211, %v1359
      %v1361 = vpop.f32.mrb[0].mxu0
      %v1362 = vpop.f32.mrb[0].mxu0
      %v1363 = vadd.f32 %v1211, %v1362
      %v1364 = vpop.f32.mrb[0].mxu0
      %1365 = vmatprep.mubr.bf16.mxu0 0
      %1366 = vmatmul.mubr.bf16.gmra.mrb[0].mxu0 %v1181
      %v1367 = vpop.f32.mrb[0].mxu0
      %v1368 = vadd.f32 %v1211, %v1367
      %v1369 = vpop.f32.mrb[0].mxu0
      %v1370 = vpop.f32.mrb[0].mxu0
      %v1371 = vadd.f32 %v1211, %v1370
      %v1372 = vpop.f32.mrb[0].mxu0
      %1373 = vmatprep.mubr.bf16.mxu0 0
      %1374 = vmatmul.mubr.bf16.gmra.mrb[0].mxu0 %v1182
      %v1375 = vpop.f32.mrb[0].mxu0
      %v1376 = vadd.f32 %v1211, %v1375
      %v1377 = vpop.f32.mrb[0].mxu0
      %v1378 = vpop.f32.mrb[0].mxu0
      %v1379 = vadd.f32 %v1211, %v1378
      %v1380 = vpop.f32.mrb[0].mxu0
      %1381 = vmatprep.mubr.bf16.mxu0 0
      %1382 = vmatmul.mubr.bf16.gmra.mrb[0].mxu0 %v1183
      %v1383 = vpop.f32.mrb[0].mxu0
      %v1384 = vadd.f32 %v1211, %v1383
      %v1385 = vpop.f32.mrb[0].mxu0
      %v1386 = vpop.f32.mrb[0].mxu0
      %v1387 = vadd.f32 %v1211, %v1386
      %v1388 = vpop.f32.mrb[0].mxu0
      %1389 = vmatprep.mubr.bf16.mxu0 0
      %1390 = vmatmul.mubr.bf16.gmra.mrb[0].mxu0 %v1184
      %v1391 = vpop.f32.mrb[0].mxu0
      %v1392 = vadd.f32 %v1211, %v1391
      %v1393 = vpop.f32.mrb[0].mxu0
      %v1394 = vpop.f32.mrb[0].mxu0
      %v1395 = vadd.f32 %v1211, %v1394
      %v1396 = vpop.f32.mrb[0].mxu0
      %1397 = vmatprep.mubr.bf16.mxu0 0
      %1398 = vmatmul.mubr.bf16.gmra.mrb[0].mxu0 %v1185
      %v1399 = vpop.f32.mrb[0].mxu0
      %v1400 = vadd.f32 %v1211, %v1399
      %v1401 = vpop.f32.mrb[0].mxu0
      %v1402 = vpop.f32.mrb[0].mxu0
      %v1403 = vadd.f32 %v1211, %v1402
      %v1404 = vpop.f32.mrb[0].mxu0
      %1405 = vmatprep.mubr.bf16.mxu0 0
      %1406 = vmatmul.mubr.bf16.gmra.mrb[0].mxu0 %v1186
      %v1407 = vpop.f32.mrb[0].mxu0
      %v1408 = vadd.f32 %v1211, %v1407
      %v1409 = vpop.f32.mrb[0].mxu0
      %v1410 = vpop.f32.mrb[0].mxu0
      %v1411 = vadd.f32 %v1211, %v1410
      %v1412 = vpop.f32.mrb[0].mxu0
      %1413 = vmatprep.mubr.bf16.mxu0 0
      %1414 = vmatmul.mubr.bf16.gmra.mrb[0].mxu0 %v1187
      %v1415 = vpop.f32.mrb[0].mxu0
      %v1416 = vadd.f32 %v1211, %v1415
      %v1417 = vpop.f32.mrb[0].mxu0
      %v1418 = vpop.f32.mrb[0].mxu0
      %v1419 = vadd.f32 %v1211, %v1418
      %v1420 = vpop.f32.mrb[0].mxu0
      %1421 = vdwg.mxu0
      %v1422 = vmax.f32 %v1296, 0.0
      %v1423 = vmax.f32 %v1299, 0.0
      %v1424 = vmax.f32 %v1304, 0.0
      %v1425 = vmax.f32 %v1307, 0.0
      %v1426 = vmax.f32 %v1312, 0.0
      %v1427 = vmax.f32 %v1315, 0.0
      %v1428 = vmax.f32 %v1320, 0.0
      %v1429 = vmax.f32 %v1323, 0.0
      %v1430 = vmax.f32 %v1328, 0.0
      %v1431 = vmax.f32 %v1331, 0.0
      %v1432 = vmax.f32 %v1336, 0.0
      %v1433 = vmax.f32 %v1339, 0.0
      %v1434 = vmax.f32 %v1344, 0.0
      %v1435 = vmax.f32 %v1347, 0.0
      %v1436 = vmax.f32 %v1352, 0.0
      %v1437 = vmax.f32 %v1355, 0.0
      %v1438 = vmax.f32 %v1360, 0.0
      %v1439 = vmax.f32 %v1363, 0.0
      %v1440 = vmax.f32 %v1368, 0.0
      %v1441 = vmax.f32 %v1371, 0.0
      %v1442 = vmax.f32 %v1376, 0.0
      %v1443 = vmax.f32 %v1379, 0.0
      %v1444 = vmax.f32 %v1384, 0.0
      %v1445 = vmax.f32 %v1387, 0.0
      %v1446 = vmax.f32 %v1392, 0.0
      %v1447 = vmax.f32 %v1395, 0.0
      %v1448 = vmax.f32 %v1400, 0.0
      %v1449 = vmax.f32 %v1403, 0.0
      %v1450 = vmax.f32 %v1408, 0.0
      %v1451 = vmax.f32 %v1411, 0.0
      %v1452 = vmax.f32 %v1416, 0.0
      %v1453 = vmax.f32 %v1419, 0.0
      %v1454 = vpack.c.bf16 %v1423, %v1422
      %v1455 = vpack.c.bf16 %v1425, %v1424
      %v1456 = vpack.c.bf16 %v1427, %v1426
      %v1457 = vpack.c.bf16 %v1429, %v1428
      %v1458 = vpack.c.bf16 %v1431, %v1430
      %v1459 = vpack.c.bf16 %v1433, %v1432
      %v1460 = vpack.c.bf16 %v1435, %v1434
      %v1461 = vpack.c.bf16 %v1437, %v1436
      %v1462 = vpack.c.bf16 %v1439, %v1438
      %v1463 = vpack.c.bf16 %v1441, %v1440
      %v1464 = vpack.c.bf16 %v1443, %v1442
      %v1465 = vpack.c.bf16 %v1445, %v1444
      %v1466 = vpack.c.bf16 %v1447, %v1446
      %v1467 = vpack.c.bf16 %v1449, %v1448
      %v1468 = vpack.c.bf16 %v1451, %v1450
      %v1469 = vpack.c.bf16 %v1453, %v1452
      %s1470 = scalar_lea.vmem %s1, 256
      %v1471 = vld [vmem:[%s1470] sm:$0xf]
      %v1472 = vld [vmem:[%s1470 + $0x4] sm:$0xf]
      %v1473 = vld [vmem:[%s1470 + $0x8] sm:$0xf]
      %v1474 = vld [vmem:[%s1470 + $0xc] sm:$0xf]
      %v1475 = vld [vmem:[%s1470 + $0x10] sm:$0xf]
      %v1476 = vld [vmem:[%s1470 + $0x14] sm:$0xf]
      %v1477 = vld [vmem:[%s1470 + $0x18] sm:$0xf]
      %v1478 = vld [vmem:[%s1470 + $0x1c] sm:$0xf]
      %v1479 = vld [vmem:[%s1470 + $0x20] sm:$0xf]
      %v1480 = vld [vmem:[%s1470 + $0x24] sm:$0xf]
      %v1481 = vld [vmem:[%s1470 + $0x28] sm:$0xf]
      %v1482 = vld [vmem:[%s1470 + $0x2c] sm:$0xf]
      %v1483 = vld [vmem:[%s1470 + $0x30] sm:$0xf]
      %v1484 = vld [vmem:[%s1470 + $0x34] sm:$0xf]
      %v1485 = vld [vmem:[%s1470 + $0x38] sm:$0xf]
      %v1486 = vld [vmem:[%s1470 + $0x3c] sm:$0xf]
      %s1487 = scalar_lea.vmem %s2, 4
      %v1488 = vld [vmem:[%s1487] sm:$0x1]
      %v1490 = vlaneseq
      %v1491 = vshrl.u32 %v1490, 7
      %v1492 = vsub.s32 0, %v1491
      %v1493 = vrot.slane %v1488, %v1492
      %v1511 = vunpack.c.l.b16 %v1471
      %v1512 = vunpack.c.l.b16 %v1472
      %v1513 = vunpack.c.l.b16 %v1473
      %v1514 = vunpack.c.l.b16 %v1474
      %v1515 = vunpack.c.l.b16 %v1475
      %v1516 = vunpack.c.l.b16 %v1476
      %v1517 = vunpack.c.l.b16 %v1477
      %v1518 = vunpack.c.l.b16 %v1478
      %v1519 = vunpack.c.l.b16 %v1479
      %v1520 = vunpack.c.l.b16 %v1480
      %v1521 = vunpack.c.l.b16 %v1481
      %v1522 = vunpack.c.l.b16 %v1482
      %v1523 = vunpack.c.l.b16 %v1483
      %v1524 = vunpack.c.l.b16 %v1484
      %v1525 = vunpack.c.l.b16 %v1485
      %v1526 = vunpack.c.l.b16 %v1486
      %v1527 = vpack.c.b16 %v1512, %v1511
      %v1528 = vpack.c.b16 %v1514, %v1513
      %v1529 = vpack.c.b16 %v1516, %v1515
      %v1530 = vpack.c.b16 %v1518, %v1517
      %v1531 = vpack.c.b16 %v1520, %v1519
      %v1532 = vpack.c.b16 %v1522, %v1521
      %v1533 = vpack.c.b16 %v1524, %v1523
      %v1534 = vpack.c.b16 %v1526, %v1525
      %1543 = vmatprep.subr.bf16.mxu0 0
      %1544 = vmatpush1.bf16.msra.mxu0 %v1527
      %1545 = vmatprep.subr.bf16.mxu0 0
      %1546 = vmatpush1.bf16.msra.mxu0 %v1528
      %1547 = vmatprep.subr.bf16.mxu0 0
      %1548 = vmatpush1.bf16.msra.mxu0 %v1529
      %1549 = vmatprep.subr.bf16.mxu0 0
      %1550 = vmatpush1.bf16.msra.mxu0 %v1530
      %1551 = vmatprep.subr.bf16.mxu0 0
      %1552 = vmatpush1.bf16.msra.mxu0 %v1531
      %1553 = vmatprep.subr.bf16.mxu0 0
      %1554 = vmatpush1.bf16.msra.mxu0 %v1532
      %1555 = vmatprep.subr.bf16.mxu0 0
      %1556 = vmatpush1.bf16.msra.mxu0 %v1533
      %1557 = vmatprep.subr.bf16.mxu0 0
      %1558 = vmatpush1.bf16.msra.mxu0 %v1534
      %1559 = vmatprep.subr.bf16.mxu0 0
      %1560 = vmatpush1.bf16.msra.mxu0 0
      %1561 = vmatprep.subr.bf16.mxu0 0
      %1562 = vmatpush1.bf16.msra.mxu0 0
      %1563 = vmatprep.subr.bf16.mxu0 0
      %1564 = vmatpush1.bf16.msra.mxu0 0
      %1565 = vmatprep.subr.bf16.mxu0 0
      %1566 = vmatpush1.bf16.msra.mxu0 0
      %1567 = vmatprep.subr.bf16.mxu0 0
      %1568 = vmatpush1.bf16.msra.mxu0 0
      %1569 = vmatprep.subr.bf16.mxu0 0
      %1570 = vmatpush1.bf16.msra.mxu0 0
      %1571 = vmatprep.subr.bf16.mxu0 0
      %1572 = vmatpush1.bf16.msra.mxu0 0
      %1573 = vmatprep.subr.bf16.mxu0 0
      %1574 = vmatpush1.bf16.msra.mxu0 0
      %1575 = vmatprep.mubr.bf16.mxu0 0
      %1576 = vmatmul.mubr.bf16.gmra.mrb[0].mxu0 %v1454
      %v1577 = vpop.f32.mrb[0].mxu0
      %v1578 = vadd.f32 %v1493, %v1577
      %v1579 = vpop.f32.mrb[0].mxu0
      %v1580 = vpop.f32.mrb[0].mxu0
      %v1581 = vadd.f32 %v1493, %v1580
      %v1582 = vpop.f32.mrb[0].mxu0
      %1583 = vmatprep.mubr.bf16.mxu0 0
      %1584 = vmatmul.mubr.bf16.gmra.mrb[0].mxu0 %v1455
      %v1585 = vpop.f32.mrb[0].mxu0
      %v1586 = vadd.f32 %v1493, %v1585
      %v1587 = vpop.f32.mrb[0].mxu0
      %v1588 = vpop.f32.mrb[0].mxu0
      %v1589 = vadd.f32 %v1493, %v1588
      %v1590 = vpop.f32.mrb[0].mxu0
      %1591 = vmatprep.mubr.bf16.mxu0 0
      %1592 = vmatmul.mubr.bf16.gmra.mrb[0].mxu0 %v1456
      %v1593 = vpop.f32.mrb[0].mxu0
      %v1594 = vadd.f32 %v1493, %v1593
      %v1595 = vpop.f32.mrb[0].mxu0
      %v1596 = vpop.f32.mrb[0].mxu0
      %v1597 = vadd.f32 %v1493, %v1596
      %v1598 = vpop.f32.mrb[0].mxu0
      %1599 = vmatprep.mubr.bf16.mxu0 0
      %1600 = vmatmul.mubr.bf16.gmra.mrb[0].mxu0 %v1457
      %v1601 = vpop.f32.mrb[0].mxu0
      %v1602 = vadd.f32 %v1493, %v1601
      %v1603 = vpop.f32.mrb[0].mxu0
      %v1604 = vpop.f32.mrb[0].mxu0
      %v1605 = vadd.f32 %v1493, %v1604
      %v1606 = vpop.f32.mrb[0].mxu0
      %1607 = vmatprep.mubr.bf16.mxu0 0
      %1608 = vmatmul.mubr.bf16.gmra.mrb[0].mxu0 %v1458
      %v1609 = vpop.f32.mrb[0].mxu0
      %v1610 = vadd.f32 %v1493, %v1609
      %v1611 = vpop.f32.mrb[0].mxu0
      %v1612 = vpop.f32.mrb[0].mxu0
      %v1613 = vadd.f32 %v1493, %v1612
      %v1614 = vpop.f32.mrb[0].mxu0
      %1615 = vmatprep.mubr.bf16.mxu0 0
      %1616 = vmatmul.mubr.bf16.gmra.mrb[0].mxu0 %v1459
      %v1617 = vpop.f32.mrb[0].mxu0
      %v1618 = vadd.f32 %v1493, %v1617
      %v1619 = vpop.f32.mrb[0].mxu0
      %v1620 = vpop.f32.mrb[0].mxu0
      %v1621 = vadd.f32 %v1493, %v1620
      %v1622 = vpop.f32.mrb[0].mxu0
      %1623 = vmatprep.mubr.bf16.mxu0 0
      %1624 = vmatmul.mubr.bf16.gmra.mrb[0].mxu0 %v1460
      %v1625 = vpop.f32.mrb[0].mxu0
      %v1626 = vadd.f32 %v1493, %v1625
      %v1627 = vpop.f32.mrb[0].mxu0
      %v1628 = vpop.f32.mrb[0].mxu0
      %v1629 = vadd.f32 %v1493, %v1628
      %v1630 = vpop.f32.mrb[0].mxu0
      %1631 = vmatprep.mubr.bf16.mxu0 0
      %1632 = vmatmul.mubr.bf16.gmra.mrb[0].mxu0 %v1461
      %v1633 = vpop.f32.mrb[0].mxu0
      %v1634 = vadd.f32 %v1493, %v1633
      %v1635 = vpop.f32.mrb[0].mxu0
      %v1636 = vpop.f32.mrb[0].mxu0
      %v1637 = vadd.f32 %v1493, %v1636
      %v1638 = vpop.f32.mrb[0].mxu0
      %1639 = vmatprep.mubr.bf16.mxu0 0
      %1640 = vmatmul.mubr.bf16.gmra.mrb[0].mxu0 %v1462
      %v1641 = vpop.f32.mrb[0].mxu0
      %v1642 = vadd.f32 %v1493, %v1641
      %v1643 = vpop.f32.mrb[0].mxu0
      %v1644 = vpop.f32.mrb[0].mxu0
      %v1645 = vadd.f32 %v1493, %v1644
      %v1646 = vpop.f32.mrb[0].mxu0
      %1647 = vmatprep.mubr.bf16.mxu0 0
      %1648 = vmatmul.mubr.bf16.gmra.mrb[0].mxu0 %v1463
      %v1649 = vpop.f32.mrb[0].mxu0
      %v1650 = vadd.f32 %v1493, %v1649
      %v1651 = vpop.f32.mrb[0].mxu0
      %v1652 = vpop.f32.mrb[0].mxu0
      %v1653 = vadd.f32 %v1493, %v1652
      %v1654 = vpop.f32.mrb[0].mxu0
      %1655 = vmatprep.mubr.bf16.mxu0 0
      %1656 = vmatmul.mubr.bf16.gmra.mrb[0].mxu0 %v1464
      %v1657 = vpop.f32.mrb[0].mxu0
      %v1658 = vadd.f32 %v1493, %v1657
      %v1659 = vpop.f32.mrb[0].mxu0
      %v1660 = vpop.f32.mrb[0].mxu0
      %v1661 = vadd.f32 %v1493, %v1660
      %v1662 = vpop.f32.mrb[0].mxu0
      %1663 = vmatprep.mubr.bf16.mxu0 0
      %1664 = vmatmul.mubr.bf16.gmra.mrb[0].mxu0 %v1465
      %v1665 = vpop.f32.mrb[0].mxu0
      %v1666 = vadd.f32 %v1493, %v1665
      %v1667 = vpop.f32.mrb[0].mxu0
      %v1668 = vpop.f32.mrb[0].mxu0
      %v1669 = vadd.f32 %v1493, %v1668
      %v1670 = vpop.f32.mrb[0].mxu0
      %1671 = vmatprep.mubr.bf16.mxu0 0
      %1672 = vmatmul.mubr.bf16.gmra.mrb[0].mxu0 %v1466
      %v1673 = vpop.f32.mrb[0].mxu0
      %v1674 = vadd.f32 %v1493, %v1673
      %v1675 = vpop.f32.mrb[0].mxu0
      %v1676 = vpop.f32.mrb[0].mxu0
      %v1677 = vadd.f32 %v1493, %v1676
      %v1678 = vpop.f32.mrb[0].mxu0
      %1679 = vmatprep.mubr.bf16.mxu0 0
      %1680 = vmatmul.mubr.bf16.gmra.mrb[0].mxu0 %v1467
      %v1681 = vpop.f32.mrb[0].mxu0
      %v1682 = vadd.f32 %v1493, %v1681
      %v1683 = vpop.f32.mrb[0].mxu0
      %v1684 = vpop.f32.mrb[0].mxu0
      %v1685 = vadd.f32 %v1493, %v1684
      %v1686 = vpop.f32.mrb[0].mxu0
      %1687 = vmatprep.mubr.bf16.mxu0 0
      %1688 = vmatmul.mubr.bf16.gmra.mrb[0].mxu0 %v1468
      %v1689 = vpop.f32.mrb[0].mxu0
      %v1690 = vadd.f32 %v1493, %v1689
      %v1691 = vpop.f32.mrb[0].mxu0
      %v1692 = vpop.f32.mrb[0].mxu0
      %v1693 = vadd.f32 %v1493, %v1692
      %v1694 = vpop.f32.mrb[0].mxu0
      %1695 = vmatprep.mubr.bf16.mxu0 0
      %1696 = vmatmul.mubr.bf16.gmra.mrb[0].mxu0 %v1469
      %v1697 = vpop.f32.mrb[0].mxu0
      %v1698 = vadd.f32 %v1493, %v1697
      %v1699 = vpop.f32.mrb[0].mxu0
      %v1700 = vpop.f32.mrb[0].mxu0
      %v1701 = vadd.f32 %v1493, %v1700
      %v1702 = vpop.f32.mrb[0].mxu0
      %1703 = vdwg.mxu0
      %v1704 = vmax.f32 %v1578, 0.0
      %v1705 = vmax.f32 %v1581, 0.0
      %v1706 = vmax.f32 %v1586, 0.0
      %v1707 = vmax.f32 %v1589, 0.0
      %v1708 = vmax.f32 %v1594, 0.0
      %v1709 = vmax.f32 %v1597, 0.0
      %v1710 = vmax.f32 %v1602, 0.0
      %v1711 = vmax.f32 %v1605, 0.0
      %v1712 = vmax.f32 %v1610, 0.0
      %v1713 = vmax.f32 %v1613, 0.0
      %v1714 = vmax.f32 %v1618, 0.0
      %v1715 = vmax.f32 %v1621, 0.0
      %v1716 = vmax.f32 %v1626, 0.0
      %v1717 = vmax.f32 %v1629, 0.0
      %v1718 = vmax.f32 %v1634, 0.0
      %v1719 = vmax.f32 %v1637, 0.0
      %v1720 = vmax.f32 %v1642, 0.0
      %v1721 = vmax.f32 %v1645, 0.0
      %v1722 = vmax.f32 %v1650, 0.0
      %v1723 = vmax.f32 %v1653, 0.0
      %v1724 = vmax.f32 %v1658, 0.0
      %v1725 = vmax.f32 %v1661, 0.0
      %v1726 = vmax.f32 %v1666, 0.0
      %v1727 = vmax.f32 %v1669, 0.0
      %v1728 = vmax.f32 %v1674, 0.0
      %v1729 = vmax.f32 %v1677, 0.0
      %v1730 = vmax.f32 %v1682, 0.0
      %v1731 = vmax.f32 %v1685, 0.0
      %v1732 = vmax.f32 %v1690, 0.0
      %v1733 = vmax.f32 %v1693, 0.0
      %v1734 = vmax.f32 %v1698, 0.0
      %v1735 = vmax.f32 %v1701, 0.0
      %v1736 = vpack.c.bf16 %v1705, %v1704
      %v1737 = vpack.c.bf16 %v1707, %v1706
      %v1738 = vpack.c.bf16 %v1709, %v1708
      %v1739 = vpack.c.bf16 %v1711, %v1710
      %v1740 = vpack.c.bf16 %v1713, %v1712
      %v1741 = vpack.c.bf16 %v1715, %v1714
      %v1742 = vpack.c.bf16 %v1717, %v1716
      %v1743 = vpack.c.bf16 %v1719, %v1718
      %v1744 = vpack.c.bf16 %v1721, %v1720
      %v1745 = vpack.c.bf16 %v1723, %v1722
      %v1746 = vpack.c.bf16 %v1725, %v1724
      %v1747 = vpack.c.bf16 %v1727, %v1726
      %v1748 = vpack.c.bf16 %v1729, %v1728
      %v1749 = vpack.c.bf16 %v1731, %v1730
      %v1750 = vpack.c.bf16 %v1733, %v1732
      %v1751 = vpack.c.bf16 %v1735, %v1734
      %s1752 = scalar_lea.vmem %s1, 320
      %v1753 = vld [vmem:[%s1752] sm:$0xf]
      %v1754 = vld [vmem:[%s1752 + $0x4] sm:$0xf]
      %v1755 = vld [vmem:[%s1752 + $0x8] sm:$0xf]
      %v1756 = vld [vmem:[%s1752 + $0xc] sm:$0xf]
      %v1757 = vld [vmem:[%s1752 + $0x10] sm:$0xf]
      %v1758 = vld [vmem:[%s1752 + $0x14] sm:$0xf]
      %v1759 = vld [vmem:[%s1752 + $0x18] sm:$0xf]
      %v1760 = vld [vmem:[%s1752 + $0x1c] sm:$0xf]
      %v1761 = vld [vmem:[%s1752 + $0x20] sm:$0xf]
      %v1762 = vld [vmem:[%s1752 + $0x24] sm:$0xf]
      %v1763 = vld [vmem:[%s1752 + $0x28] sm:$0xf]
      %v1764 = vld [vmem:[%s1752 + $0x2c] sm:$0xf]
      %v1765 = vld [vmem:[%s1752 + $0x30] sm:$0xf]
      %v1766 = vld [vmem:[%s1752 + $0x34] sm:$0xf]
      %v1767 = vld [vmem:[%s1752 + $0x38] sm:$0xf]
      %v1768 = vld [vmem:[%s1752 + $0x3c] sm:$0xf]
      %s1769 = scalar_lea.vmem %s2, 5
      %v1770 = vld [vmem:[%s1769] sm:$0x1]
      %v1772 = vlaneseq
      %v1773 = vshrl.u32 %v1772, 7
      %v1774 = vsub.s32 0, %v1773
      %v1775 = vrot.slane %v1770, %v1774
      %v1793 = vunpack.c.l.b16 %v1753
      %v1794 = vunpack.c.l.b16 %v1754
      %v1795 = vunpack.c.l.b16 %v1755
      %v1796 = vunpack.c.l.b16 %v1756
      %v1797 = vunpack.c.l.b16 %v1757
      %v1798 = vunpack.c.l.b16 %v1758
      %v1799 = vunpack.c.l.b16 %v1759
      %v1800 = vunpack.c.l.b16 %v1760
      %v1801 = vunpack.c.l.b16 %v1761
      %v1802 = vunpack.c.l.b16 %v1762
      %v1803 = vunpack.c.l.b16 %v1763
      %v1804 = vunpack.c.l.b16 %v1764
      %v1805 = vunpack.c.l.b16 %v1765
      %v1806 = vunpack.c.l.b16 %v1766
      %v1807 = vunpack.c.l.b16 %v1767
      %v1808 = vunpack.c.l.b16 %v1768
      %v1809 = vpack.c.b16 %v1794, %v1793
      %v1810 = vpack.c.b16 %v1796, %v1795
      %v1811 = vpack.c.b16 %v1798, %v1797
      %v1812 = vpack.c.b16 %v1800, %v1799
      %v1813 = vpack.c.b16 %v1802, %v1801
      %v1814 = vpack.c.b16 %v1804, %v1803
      %v1815 = vpack.c.b16 %v1806, %v1805
      %v1816 = vpack.c.b16 %v1808, %v1807
      %1825 = vmatprep.subr.bf16.mxu0 0
      %1826 = vmatpush1.bf16.msra.mxu0 %v1809
      %1827 = vmatprep.subr.bf16.mxu0 0
      %1828 = vmatpush1.bf16.msra.mxu0 %v1810
      %1829 = vmatprep.subr.bf16.mxu0 0
      %1830 = vmatpush1.bf16.msra.mxu0 %v1811
      %1831 = vmatprep.subr.bf16.mxu0 0
      %1832 = vmatpush1.bf16.msra.mxu0 %v1812
      %1833 = vmatprep.subr.bf16.mxu0 0
      %1834 = vmatpush1.bf16.msra.mxu0 %v1813
      %1835 = vmatprep.subr.bf16.mxu0 0
      %1836 = vmatpush1.bf16.msra.mxu0 %v1814
      %1837 = vmatprep.subr.bf16.mxu0 0
      %1838 = vmatpush1.bf16.msra.mxu0 %v1815
      %1839 = vmatprep.subr.bf16.mxu0 0
      %1840 = vmatpush1.bf16.msra.mxu0 %v1816
      %1841 = vmatprep.subr.bf16.mxu0 0
      %1842 = vmatpush1.bf16.msra.mxu0 0
      %1843 = vmatprep.subr.bf16.mxu0 0
      %1844 = vmatpush1.bf16.msra.mxu0 0
      %1845 = vmatprep.subr.bf16.mxu0 0
      %1846 = vmatpush1.bf16.msra.mxu0 0
      %1847 = vmatprep.subr.bf16.mxu0 0
      %1848 = vmatpush1.bf16.msra.mxu0 0
      %1849 = vmatprep.subr.bf16.mxu0 0
      %1850 = vmatpush1.bf16.msra.mxu0 0
      %1851 = vmatprep.subr.bf16.mxu0 0
      %1852 = vmatpush1.bf16.msra.mxu0 0
      %1853 = vmatprep.subr.bf16.mxu0 0
      %1854 = vmatpush1.bf16.msra.mxu0 0
      %1855 = vmatprep.subr.bf16.mxu0 0
      %1856 = vmatpush1.bf16.msra.mxu0 0
      %1857 = vmatprep.mubr.bf16.mxu0 0
      %1858 = vmatmul.mubr.bf16.gmra.mrb[0].mxu0 %v1736
      %v1859 = vpop.f32.mrb[0].mxu0
      %v1860 = vadd.f32 %v1775, %v1859
      %v1861 = vpop.f32.mrb[0].mxu0
      %v1862 = vpop.f32.mrb[0].mxu0
      %v1863 = vadd.f32 %v1775, %v1862
      %v1864 = vpop.f32.mrb[0].mxu0
      %1865 = vmatprep.mubr.bf16.mxu0 0
      %1866 = vmatmul.mubr.bf16.gmra.mrb[0].mxu0 %v1737
      %v1867 = vpop.f32.mrb[0].mxu0
      %v1868 = vadd.f32 %v1775, %v1867
      %v1869 = vpop.f32.mrb[0].mxu0
      %v1870 = vpop.f32.mrb[0].mxu0
      %v1871 = vadd.f32 %v1775, %v1870
      %v1872 = vpop.f32.mrb[0].mxu0
      %1873 = vmatprep.mubr.bf16.mxu0 0
      %1874 = vmatmul.mubr.bf16.gmra.mrb[0].mxu0 %v1738
      %v1875 = vpop.f32.mrb[0].mxu0
      %v1876 = vadd.f32 %v1775, %v1875
      %v1877 = vpop.f32.mrb[0].mxu0
      %v1878 = vpop.f32.mrb[0].mxu0
      %v1879 = vadd.f32 %v1775, %v1878
      %v1880 = vpop.f32.mrb[0].mxu0
      %1881 = vmatprep.mubr.bf16.mxu0 0
      %1882 = vmatmul.mubr.bf16.gmra.mrb[0].mxu0 %v1739
      %v1883 = vpop.f32.mrb[0].mxu0
      %v1884 = vadd.f32 %v1775, %v1883
      %v1885 = vpop.f32.mrb[0].mxu0
      %v1886 = vpop.f32.mrb[0].mxu0
      %v1887 = vadd.f32 %v1775, %v1886
      %v1888 = vpop.f32.mrb[0].mxu0
      %1889 = vmatprep.mubr.bf16.mxu0 0
      %1890 = vmatmul.mubr.bf16.gmra.mrb[0].mxu0 %v1740
      %v1891 = vpop.f32.mrb[0].mxu0
      %v1892 = vadd.f32 %v1775, %v1891
      %v1893 = vpop.f32.mrb[0].mxu0
      %v1894 = vpop.f32.mrb[0].mxu0
      %v1895 = vadd.f32 %v1775, %v1894
      %v1896 = vpop.f32.mrb[0].mxu0
      %1897 = vmatprep.mubr.bf16.mxu0 0
      %1898 = vmatmul.mubr.bf16.gmra.mrb[0].mxu0 %v1741
      %v1899 = vpop.f32.mrb[0].mxu0
      %v1900 = vadd.f32 %v1775, %v1899
      %v1901 = vpop.f32.mrb[0].mxu0
      %v1902 = vpop.f32.mrb[0].mxu0
      %v1903 = vadd.f32 %v1775, %v1902
      %v1904 = vpop.f32.mrb[0].mxu0
      %1905 = vmatprep.mubr.bf16.mxu0 0
      %1906 = vmatmul.mubr.bf16.gmra.mrb[0].mxu0 %v1742
      %v1907 = vpop.f32.mrb[0].mxu0
      %v1908 = vadd.f32 %v1775, %v1907
      %v1909 = vpop.f32.mrb[0].mxu0
      %v1910 = vpop.f32.mrb[0].mxu0
      %v1911 = vadd.f32 %v1775, %v1910
      %v1912 = vpop.f32.mrb[0].mxu0
      %1913 = vmatprep.mubr.bf16.mxu0 0
      %1914 = vmatmul.mubr.bf16.gmra.mrb[0].mxu0 %v1743
      %v1915 = vpop.f32.mrb[0].mxu0
      %v1916 = vadd.f32 %v1775, %v1915
      %v1917 = vpop.f32.mrb[0].mxu0
      %v1918 = vpop.f32.mrb[0].mxu0
      %v1919 = vadd.f32 %v1775, %v1918
      %v1920 = vpop.f32.mrb[0].mxu0
      %1921 = vmatprep.mubr.bf16.mxu0 0
      %1922 = vmatmul.mubr.bf16.gmra.mrb[0].mxu0 %v1744
      %v1923 = vpop.f32.mrb[0].mxu0
      %v1924 = vadd.f32 %v1775, %v1923
      %v1925 = vpop.f32.mrb[0].mxu0
      %v1926 = vpop.f32.mrb[0].mxu0
      %v1927 = vadd.f32 %v1775, %v1926
      %v1928 = vpop.f32.mrb[0].mxu0
      %1929 = vmatprep.mubr.bf16.mxu0 0
      %1930 = vmatmul.mubr.bf16.gmra.mrb[0].mxu0 %v1745
      %v1931 = vpop.f32.mrb[0].mxu0
      %v1932 = vadd.f32 %v1775, %v1931
      %v1933 = vpop.f32.mrb[0].mxu0
      %v1934 = vpop.f32.mrb[0].mxu0
      %v1935 = vadd.f32 %v1775, %v1934
      %v1936 = vpop.f32.mrb[0].mxu0
      %1937 = vmatprep.mubr.bf16.mxu0 0
      %1938 = vmatmul.mubr.bf16.gmra.mrb[0].mxu0 %v1746
      %v1939 = vpop.f32.mrb[0].mxu0
      %v1940 = vadd.f32 %v1775, %v1939
      %v1941 = vpop.f32.mrb[0].mxu0
      %v1942 = vpop.f32.mrb[0].mxu0
      %v1943 = vadd.f32 %v1775, %v1942
      %v1944 = vpop.f32.mrb[0].mxu0
      %1945 = vmatprep.mubr.bf16.mxu0 0
      %1946 = vmatmul.mubr.bf16.gmra.mrb[0].mxu0 %v1747
      %v1947 = vpop.f32.mrb[0].mxu0
      %v1948 = vadd.f32 %v1775, %v1947
      %v1949 = vpop.f32.mrb[0].mxu0
      %v1950 = vpop.f32.mrb[0].mxu0
      %v1951 = vadd.f32 %v1775, %v1950
      %v1952 = vpop.f32.mrb[0].mxu0
      %1953 = vmatprep.mubr.bf16.mxu0 0
      %1954 = vmatmul.mubr.bf16.gmra.mrb[0].mxu0 %v1748
      %v1955 = vpop.f32.mrb[0].mxu0
      %v1956 = vadd.f32 %v1775, %v1955
      %v1957 = vpop.f32.mrb[0].mxu0
      %v1958 = vpop.f32.mrb[0].mxu0
      %v1959 = vadd.f32 %v1775, %v1958
      %v1960 = vpop.f32.mrb[0].mxu0
      %1961 = vmatprep.mubr.bf16.mxu0 0
      %1962 = vmatmul.mubr.bf16.gmra.mrb[0].mxu0 %v1749
      %v1963 = vpop.f32.mrb[0].mxu0
      %v1964 = vadd.f32 %v1775, %v1963
      %v1965 = vpop.f32.mrb[0].mxu0
      %v1966 = vpop.f32.mrb[0].mxu0
      %v1967 = vadd.f32 %v1775, %v1966
      %v1968 = vpop.f32.mrb[0].mxu0
      %1969 = vmatprep.mubr.bf16.mxu0 0
      %1970 = vmatmul.mubr.bf16.gmra.mrb[0].mxu0 %v1750
      %v1971 = vpop.f32.mrb[0].mxu0
      %v1972 = vadd.f32 %v1775, %v1971
      %v1973 = vpop.f32.mrb[0].mxu0
      %v1974 = vpop.f32.mrb[0].mxu0
      %v1975 = vadd.f32 %v1775, %v1974
      %v1976 = vpop.f32.mrb[0].mxu0
      %1977 = vmatprep.mubr.bf16.mxu0 0
      %1978 = vmatmul.mubr.bf16.gmra.mrb[0].mxu0 %v1751
      %v1979 = vpop.f32.mrb[0].mxu0
      %v1980 = vadd.f32 %v1775, %v1979
      %v1981 = vpop.f32.mrb[0].mxu0
      %v1982 = vpop.f32.mrb[0].mxu0
      %v1983 = vadd.f32 %v1775, %v1982
      %v1984 = vpop.f32.mrb[0].mxu0
      %1985 = vdwg.mxu0
      %1986 = vst [vmem:[%s213] sm:$0xff] %v1860
      %1987 = vst [vmem:[%s213 + $0x8] sm:$0xff] %v1863
      %1988 = vst [vmem:[%s213 + $0x10] sm:$0xff] %v1868
      %1989 = vst [vmem:[%s213 + $0x18] sm:$0xff] %v1871
      %1990 = vst [vmem:[%s213 + $0x20] sm:$0xff] %v1876
      %1991 = vst [vmem:[%s213 + $0x28] sm:$0xff] %v1879
      %1992 = vst [vmem:[%s213 + $0x30] sm:$0xff] %v1884
      %1993 = vst [vmem:[%s213 + $0x38] sm:$0xff] %v1887
      %1994 = vst [vmem:[%s213 + $0x40] sm:$0xff] %v1892
      %1995 = vst [vmem:[%s213 + $0x48] sm:$0xff] %v1895
      %1996 = vst [vmem:[%s213 + $0x50] sm:$0xff] %v1900
      %1997 = vst [vmem:[%s213 + $0x58] sm:$0xff] %v1903
      %1998 = vst [vmem:[%s213 + $0x60] sm:$0xff] %v1908
      %1999 = vst [vmem:[%s213 + $0x68] sm:$0xff] %v1911
      %2000 = vst [vmem:[%s213 + $0x70] sm:$0xff] %v1916
      %2001 = vst [vmem:[%s213 + $0x78] sm:$0xff] %v1919
      %2002 = vst [vmem:[%s213 + $0x80] sm:$0xff] %v1924
      %2003 = vst [vmem:[%s213 + $0x88] sm:$0xff] %v1927
      %2004 = vst [vmem:[%s213 + $0x90] sm:$0xff] %v1932
      %2005 = vst [vmem:[%s213 + $0x98] sm:$0xff] %v1935
      %2006 = vst [vmem:[%s213 + $0xa0] sm:$0xff] %v1940
      %2007 = vst [vmem:[%s213 + $0xa8] sm:$0xff] %v1943
      %2008 = vst [vmem:[%s213 + $0xb0] sm:$0xff] %v1948
      %2009 = vst [vmem:[%s213 + $0xb8] sm:$0xff] %v1951
      %2010 = vst [vmem:[%s213 + $0xc0] sm:$0xff] %v1956
      %2011 = vst [vmem:[%s213 + $0xc8] sm:$0xff] %v1959
      %2012 = vst [vmem:[%s213 + $0xd0] sm:$0xff] %v1964
      %2013 = vst [vmem:[%s213 + $0xd8] sm:$0xff] %v1967
      %2014 = vst [vmem:[%s213 + $0xe0] sm:$0xff] %v1972
      %2015 = vst [vmem:[%s213 + $0xe8] sm:$0xff] %v1975
      %2016 = vst [vmem:[%s213 + $0xf0] sm:$0xff] %v1980
      %2017 = vst [vmem:[%s213 + $0xf8] sm:$0xff] %v1983
      %s2018 = smul.u32 32, %s16
      %p2019 = scmp.lt.s32.totalorder %s2018, 63
      %s2020 = scalar_select %p2019, %s2018, 63
      %s2021 = smul.addr %s2020, 8
      %s2022 = scalar_lea.vmem %s3, %s2021
      %s2023 = smul.u32 32, %s16
      %p2024 = scmp.lt.s32.totalorder %s2023, 63
      %s2025 = scalar_select %p2024, %s2023, 63
      %s2026 = smul.addr %s2025, 8
      %s2027 = scalar_lea.vmem %s4, %s2026
      // Predicated region
      $region33: #{autoencoder_forward.1} parent=31 // pred_check
        %p2028 = pneg %p102
      $region34: #{autoencoder_forward.1} parent=31 // pred_check_branch
        %2030 = sbr.rel (%p2028) target = $region36
      $region35: #{autoencoder_forward.1} parent=31 // pred_region
        %s2031 = smul.u32 32, %s16
      $region36: #{autoencoder_forward.1} parent=31 // pred_fallthru
        _
      // Predicated region
      $region37: #{autoencoder_forward.1} parent=31 // pred_check
        %p2032 = pneg %p128
      $region38: #{autoencoder_forward.1} parent=31 // pred_check_branch
        %2034 = sbr.rel (%p2032) target = $region40
      $region39: #{autoencoder_forward.1} parent=31 // pred_region
        %s2035 = smul.u32 32, %s16
      $region40: #{autoencoder_forward.1} parent=31 // pred_fallthru
        _
    $region32: #{autoencoder_forward.1} parent=5 // pred_fallthru
      _
    %p2036 = scmp.le.s32.totalorder 2, %s11
    // Predicated region
    $region41: #{autoencoder_forward.1} parent=5 // pred_check
      %p2037 = pneg %p2036
    $region42: #{autoencoder_forward.1} parent=5 // pred_check_branch
      %2039 = sbr.rel (%p2037) target = $region44
    $region43: #{autoencoder_forward.1} parent=5 // pred_region
      %s2040 = ssub.s32 %s11, 2
      // Predicated region
      $region45: #{autoencoder_forward.1} parent=43 // pred_check
        %p2041 = pneg %p108
      $region46: #{autoencoder_forward.1} parent=43 // pred_check_branch
        %2043 = sbr.rel (%p2041) target = $region48
      $region47: #{autoencoder_forward.1} parent=43 // pred_region
        %s2044 = smul.u32 32, %s17
        %p2045 = scmp.lt.s32.totalorder %s2044, 63
        %s2046 = scalar_select %p2045, %s2044, 63
        %s2047 = smul.addr %s2046, 8
        %s2048 = scalar_lea.vmem %s3, %s2047
      $region48: #{autoencoder_forward.1} parent=43 // pred_fallthru
        _
      // Predicated region
      $region49: #{autoencoder_forward.1} parent=43 // pred_check
        %p2049 = pneg %p134
      $region50: #{autoencoder_forward.1} parent=43 // pred_check_branch
        %2051 = sbr.rel (%p2049) target = $region52
      $region51: #{autoencoder_forward.1} parent=43 // pred_region
        %s2052 = smul.u32 32, %s17
        %p2053 = scmp.lt.s32.totalorder %s2052, 63
        %s2054 = scalar_select %p2053, %s2052, 63
        %s2055 = smul.addr %s2054, 8
        %s2056 = scalar_lea.vmem %s4, %s2055
      $region52: #{autoencoder_forward.1} parent=43 // pred_fallthru
        _
    $region44: #{autoencoder_forward.1} parent=5 // pred_fallthru
      _
  $region6: #{autoencoder_forward.1} parent=0 // loop_footer
    %s15 = sadd.s32 1, %s11
  $region7: #{autoencoder_forward.1} parent=0 // loop_footer_branch
    %10 = sbr.rel target = $region3
  $region8: #{autoencoder_forward.1} parent=0 // loop_exit
    _

</llo_original>
